<compile_context>
chip_gen: v7x
topology: tpu7x:2x2x1
jax: 0.10.0
libtpu: 0.0.40
codegen_flags: <defaults>
</compile_context>

<pallas_src>
import jax
import jax.numpy as jnp
import numpy as np
from jax.experimental import pallas as pl
from jax.experimental.pallas import tpu as pltpu


# ----------------------------------------------------------------------------
# Fused kernel (one grid step = one image x one Cout3 tile)
#   x_ref : (Cin, P)      input embedded on the final (H+6, W+6) grid
#   mK    : (1, P)        {0,1} masks modelling the inter-stage zero padding
#   w1/w2 : (Cin, Cin), b1/b2 : (Cin, 1)   scalar adds folded into biases
#   w3    : (TILE_C, Cin), b3 : (TILE_C, 1)   current Cout3 tile
#   o_ref : (TILE_C, P)   channels-major output tile (== NCHW layout)
# ----------------------------------------------------------------------------
def _fused_conv_kernel(x_ref, m1_ref, m2_ref, w1_ref, b1_ref, w2_ref, b2_ref,
                       w3_ref, b3_ref, o_ref):
    x = x_ref[...]
    v1 = jnp.dot(w1_ref[...], x,
                 preferred_element_type=jnp.float32) + b1_ref[...]
    v1 = v1 * m1_ref[...]          # zero outside the v1 grid (conv2's zero pad)
    v2 = jnp.dot(w2_ref[...], v1,
                 preferred_element_type=jnp.float32) + b2_ref[...]
    v2 = v2 * m2_ref[...]          # zero outside the v2 grid (conv3's zero pad)
    o_ref[...] = jnp.dot(w3_ref[...], v2,
                         preferred_element_type=jnp.float32) + b3_ref[...]


def _fused_forward(x_pad, m1, m2, w1, b1e, w2, b2e, w3, b3e, *, tile_c):
    """x_pad: (N, Cin, P) -> (N, Cout3, P), all three 1x1 convs fused."""
    N, Cin, P = x_pad.shape
    Cout3 = w3.shape[0]
    n_ct = Cout3 // tile_c
    grid = (N, n_ct)

    # Advisory cost for XLA's scheduler.
    flops = N * n_ct * 2 * P * Cin * (2 * Cin + tile_c)
    bytes_accessed = (N * Cout3 * P * 4            # output writes (dominant)
                      + N * Cin * P * 4            # input reads
                      + Cout3 * (Cin + 1) * 4      # conv3 params
                      + 2 * (Cin * Cin + Cin) * 4  # conv1/2 params
                      + 2 * P * 4)                 # masks

    out = pl.pallas_call(
        _fused_conv_kernel,
        out_shape=jax.ShapeDtypeStruct((N, Cout3, P), jnp.float32),
        grid_spec=pltpu.PrefetchScalarGridSpec(
            num_scalar_prefetch=0,
            grid=grid,
            in_specs=[
                pl.BlockSpec((None, Cin, P), lambda n, c: (n, 0, 0)),   # x (resident across c)
                pl.BlockSpec((1, P),        lambda n, c: (0, 0)),       # mask v1 grid
                pl.BlockSpec((1, P),        lambda n, c: (0, 0)),       # mask v2 grid
                pl.BlockSpec((Cin, Cin),    lambda n, c: (0, 0)),       # w1
                pl.BlockSpec((Cin, 1),      lambda n, c: (0, 0)),       # b1 (+1.1)
                pl.BlockSpec((Cin, Cin),    lambda n, c: (0, 0)),       # w2
                pl.BlockSpec((Cin, 1),      lambda n, c: (0, 0)),       # b2 (+2.2)
                pl.BlockSpec((tile_c, Cin), lambda n, c: (c, 0)),       # w3 tile
                pl.BlockSpec((tile_c, 1),   lambda n, c: (c, 0)),       # b3 tile (+3.3-23.4)
            ],
            out_specs=pl.BlockSpec((None, tile_c, P), lambda n, c: (n, c, 0)),
        ),
        compiler_params=pltpu.CompilerParams(
            dimension_semantics=("parallel", "parallel")),
        cost_estimate=pl.CostEstimate(flops=flops, transcendentals=0,
                                      bytes_accessed=bytes_accessed),
    )(x_pad, m1, m2, w1, b1e, w2, b2e, w3, b3e)
    return out


# ----------------------------------------------------------------------------
# Model
# ----------------------------------------------------------------------------
def init_params(key):
    """Deterministic parameter init (Conv2d 1x1 weights stored as (Cout, Cin))."""
    def conv_init(k, cout, cin):
        kw, kb = jax.random.split(k)
        bound = 1.0 / np.sqrt(cin)  # 1x1 kernel -> fan_in = cin
        w = jax.random.uniform(kw, (cout, cin), jnp.float32, -bound, bound)
        b = jax.random.uniform(kb, (cout,), jnp.float32, -bound, bound)
        return w, b

    k1, k2, k3 = jax.random.split(key, 3)
    return (conv_init(k1, 32, 32), conv_init(k2, 32, 32), conv_init(k3, 2048, 32))


@jax.jit
def model_forward(x_nchw, params):
    (w1, b1), (w2, b2), (w3, b3) = params
    N, Cin, H, W = x_nchw.shape
    H3, W3 = H + 6, W + 6
    P = H3 * W3
    Cout3 = w3.shape[0]

    # Embed the whole batch once on the final (H+6, W+6) grid (offset 3 =
    # cumulative padding of 3 convs); the reshape to (N, Cin, P) is metadata-only.
    x_pad = jnp.pad(x_nchw, ((0, 0), (0, 0), (3, 3), (3, 3)))
    x_pad = x_pad.reshape(N, Cin, P).astype(jnp.float32)

    # {0,1} masks: which final-grid pixels lie inside the v1 / v2 grids.
    # (numpy on static shapes -> baked-in constants, no runtime ops.)
    ii = np.arange(H3).reshape(H3, 1)
    jj = np.arange(W3).reshape(1, W3)
    m1_np = ((ii >= 2) & (ii < H3 - 2)) & ((jj >= 2) & (jj < W3 - 2))
    m2_np = ((ii >= 1) & (ii < H3 - 1)) & ((jj >= 1) & (jj < W3 - 1))
    m1 = jnp.asarray(m1_np.astype(np.float32).reshape(1, P))
    m2 = jnp.asarray(m2_np.astype(np.float32).reshape(1, P))

    # Fold the scalar adds into the biases; biases as columns for lane broadcast.
    w1 = w1.astype(jnp.float32)
    w2 = w2.astype(jnp.float32)
    w3 = w3.astype(jnp.float32)
    b1e = (b1 + 1.1).astype(jnp.float32).reshape(-1, 1)
    b2e = (b2 + 2.2).astype(jnp.float32).reshape(-1, 1)
    b3e = (b3 + 3.3 - 23.4).astype(jnp.float32).reshape(-1, 1)  # fuse +3.3 and -23.4

    tile_c = min(512, Cout3)
    assert Cout3 % tile_c == 0
    out2d = _fused_forward(x_pad, m1, m2, w1, b1e, w2, b2e, w3, b3e,
                           tile_c=tile_c)
    # Metadata-only reshape: (N, Cout3, P) row-major == (N, Cout3, H3, W3) NCHW.
    return out2d.reshape(N, Cout3, H3, W3)


# ----------------------------------------------------------------------------
# Pure-JAX reference (for correctness check)
# ----------------------------------------------------------------------------
def _ref_conv1x1_pad1(x_nhwc, w, b, add_const):
    xp = jnp.pad(x_nhwc, ((0, 0), (1, 1), (1, 1), (0, 0)))
    y = jnp.einsum("nhwc,oc->nhwo", xp, w) + b
    return y + add_const


def model_forward_ref(x_nchw, params):
    (w1, b1), (w2, b2), (w3, b3) = params
    x = jnp.transpose(x_nchw, (0, 2, 3, 1))
    v1 = _ref_conv1x1_pad1(x, w1, b1, 1.1)
    v2 = _ref_conv1x1_pad1(v1, w2, b2, 2.2)
    v3 = _ref_conv1x1_pad1(v2, w3, b3, 3.3)
    return jnp.transpose(v3 - 23.4, (0, 3, 1, 2))


if __name__ == "__main__":
    key = jax.random.PRNGKey(0)
    k_x, k_p = jax.random.split(key)

    # Small-but-consistent input: conv1 requires 32 input channels.
    x = jax.random.normal(k_x, (2, 32, 16, 16), jnp.float32)
    params = init_params(k_p)

    out = jax.block_until_ready(model_forward(x, params))
    assert out.shape == (2, 2048, 22, 22), out.shape

    ref = jax.block_until_ready(model_forward_ref(x, params))
    np.testing.assert_allclose(np.asarray(out), np.asarray(ref),
                               rtol=1e-5, atol=1e-4)

    print("KERNEL_OK")
</pallas_src>

<mosaic_0001>
module attributes {stable_mosaic.version = 11 : i64} {
  func.func @_fused_conv_kernel(%arg0: i32, %arg1: i32, %arg2: memref<1x32x484xf32, #tpu.memory_space<vmem>>, %arg3: memref<1x484xf32, #tpu.memory_space<vmem>>, %arg4: memref<1x484xf32, #tpu.memory_space<vmem>>, %arg5: memref<32x32xf32, #tpu.memory_space<vmem>>, %arg6: memref<32x1xf32, #tpu.memory_space<vmem>>, %arg7: memref<32x32xf32, #tpu.memory_space<vmem>>, %arg8: memref<32x1xf32, #tpu.memory_space<vmem>>, %arg9: memref<512x32xf32, #tpu.memory_space<vmem>>, %arg10: memref<512x1xf32, #tpu.memory_space<vmem>>, %arg11: memref<1x512x484xf32, #tpu.memory_space<vmem>>) attributes {dimension_semantics = [#tpu.dimension_semantics<parallel>, #tpu.dimension_semantics<parallel>], iteration_bounds = array<i64: 2, 4>, scalar_prefetch = 0 : i64, scratch_operands = 0 : i64, tpu.core_type = #tpu.core_type<tc>, window_params = [{transform_indices = @transform_0, window_bounds = array<i64: 1, 32, 484>}, {pipeline_mode = #tpu.pipeline_mode<synchronous>, transform_indices = @transform_1, window_bounds = array<i64: 1, 484>}, {pipeline_mode = #tpu.pipeline_mode<synchronous>, transform_indices = @transform_2, window_bounds = array<i64: 1, 484>}, {pipeline_mode = #tpu.pipeline_mode<synchronous>, transform_indices = @transform_3, window_bounds = array<i64: 32, 32>}, {pipeline_mode = #tpu.pipeline_mode<synchronous>, transform_indices = @transform_4, window_bounds = array<i64: 32, 1>}, {pipeline_mode = #tpu.pipeline_mode<synchronous>, transform_indices = @transform_5, window_bounds = array<i64: 32, 32>}, {pipeline_mode = #tpu.pipeline_mode<synchronous>, transform_indices = @transform_6, window_bounds = array<i64: 32, 1>}, {transform_indices = @transform_7, window_bounds = array<i64: 512, 32>}, {transform_indices = @transform_8, window_bounds = array<i64: 512, 1>}, {transform_indices = @transform_9, window_bounds = array<i64: 1, 512, 484>}]} {
    %c0 = arith.constant 0 : index
    %c0_0 = arith.constant 0 : index
    %c0_1 = arith.constant 0 : index
    %0 = vector.load %arg2[%c0, %c0_0, %c0_1] : memref<1x32x484xf32, #tpu.memory_space<vmem>>, vector<1x32x484xf32>
    %1 = vector.shape_cast %0 : vector<1x32x484xf32> to vector<32x484xf32>
    %c0_2 = arith.constant 0 : index
    %c0_3 = arith.constant 0 : index
    %2 = vector.load %arg5[%c0_2, %c0_3] : memref<32x32xf32, #tpu.memory_space<vmem>>, vector<32x32xf32>
    %cst = arith.constant dense<0.000000e+00> : vector<32x484xf32>
    %3 = tpu.matmul %2, %1, %cst {dimension_numbers = #tpu.dot_dimension_numbers<[1], [0], [0], [1], [0, 0, 1, 1], [], []>} : vector<32x32xf32>, vector<32x484xf32>, vector<32x484xf32> -> vector<32x484xf32>
    %c0_4 = arith.constant 0 : index
    %c0_5 = arith.constant 0 : index
    %4 = vector.load %arg6[%c0_4, %c0_5] : memref<32x1xf32, #tpu.memory_space<vmem>>, vector<32x1xf32>
    %5 = vector.broadcast %4 : vector<32x1xf32> to vector<32x484xf32>
    %6 = arith.addf %3, %5 : vector<32x484xf32>
    %c0_6 = arith.constant 0 : index
    %c0_7 = arith.constant 0 : index
    %7 = vector.load %arg3[%c0_6, %c0_7] : memref<1x484xf32, #tpu.memory_space<vmem>>, vector<1x484xf32>
    %8 = vector.broadcast %7 : vector<1x484xf32> to vector<32x484xf32>
    %9 = arith.mulf %6, %8 : vector<32x484xf32>
    %c0_8 = arith.constant 0 : index
    %c0_9 = arith.constant 0 : index
    %10 = vector.load %arg7[%c0_8, %c0_9] : memref<32x32xf32, #tpu.memory_space<vmem>>, vector<32x32xf32>
    %cst_10 = arith.constant dense<0.000000e+00> : vector<32x484xf32>
    %11 = tpu.matmul %10, %9, %cst_10 {dimension_numbers = #tpu.dot_dimension_numbers<[1], [0], [0], [1], [0, 0, 1, 1], [], []>} : vector<32x32xf32>, vector<32x484xf32>, vector<32x484xf32> -> vector<32x484xf32>
    %c0_11 = arith.constant 0 : index
    %c0_12 = arith.constant 0 : index
    %12 = vector.load %arg8[%c0_11, %c0_12] : memref<32x1xf32, #tpu.memory_space<vmem>>, vector<32x1xf32>
    %13 = vector.broadcast %12 : vector<32x1xf32> to vector<32x484xf32>
    %14 = arith.addf %11, %13 : vector<32x484xf32>
    %c0_13 = arith.constant 0 : index
    %c0_14 = arith.constant 0 : index
    %15 = vector.load %arg4[%c0_13, %c0_14] : memref<1x484xf32, #tpu.memory_space<vmem>>, vector<1x484xf32>
    %16 = vector.broadcast %15 : vector<1x484xf32> to vector<32x484xf32>
    %17 = arith.mulf %14, %16 : vector<32x484xf32>
    %c0_15 = arith.constant 0 : index
    %c0_16 = arith.constant 0 : index
    %18 = vector.load %arg9[%c0_15, %c0_16] : memref<512x32xf32, #tpu.memory_space<vmem>>, vector<512x32xf32>
    %cst_17 = arith.constant dense<0.000000e+00> : vector<512x484xf32>
    %19 = tpu.matmul %18, %17, %cst_17 {dimension_numbers = #tpu.dot_dimension_numbers<[1], [0], [0], [1], [0, 0, 1, 1], [], []>} : vector<512x32xf32>, vector<32x484xf32>, vector<512x484xf32> -> vector<512x484xf32>
    %c0_18 = arith.constant 0 : index
    %c0_19 = arith.constant 0 : index
    %20 = vector.load %arg10[%c0_18, %c0_19] : memref<512x1xf32, #tpu.memory_space<vmem>>, vector<512x1xf32>
    %21 = vector.broadcast %20 : vector<512x1xf32> to vector<512x484xf32>
    %22 = arith.addf %19, %21 : vector<512x484xf32>
    %c0_20 = arith.constant 0 : index
    %c0_21 = arith.constant 0 : index
    %c0_22 = arith.constant 0 : index
    %23 = vector.load %arg11[%c0_20, %c0_21, %c0_22] : memref<1x512x484xf32, #tpu.memory_space<vmem>>, vector<1x512x484xf32>
    %24 = vector.shape_cast %23 : vector<1x512x484xf32> to vector<512x484xf32>
    %25 = vector.shape_cast %22 : vector<512x484xf32> to vector<1x512x484xf32>
    tpu.vector_store %arg11[%c0_20, %c0_21, %c0_22], %25 {strides = array<i32>} : memref<1x512x484xf32, #tpu.memory_space<vmem>>, vector<1x512x484xf32>,
    return
  }
  func.func @transform_0(%arg0: i32, %arg1: i32) -> (i32, i32, i32) {
    %c0_i32 = arith.constant 0 : i32
    %c0_i32_0 = arith.constant 0 : i32
    %c0_i32_1 = arith.constant 0 : i32
    return %arg0, %c0_i32, %c0_i32_0 : i32, i32, i32
  }
  func.func @transform_1(%arg0: i32, %arg1: i32) -> (i32, i32) {
    %c0_i32 = arith.constant 0 : i32
    %c0_i32_0 = arith.constant 0 : i32
    %c0_i32_1 = arith.constant 0 : i32
    return %c0_i32, %c0_i32_0 : i32, i32
  }
  func.func @transform_2(%arg0: i32, %arg1: i32) -> (i32, i32) {
    %c0_i32 = arith.constant 0 : i32
    %c0_i32_0 = arith.constant 0 : i32
    %c0_i32_1 = arith.constant 0 : i32
    return %c0_i32, %c0_i32_0 : i32, i32
  }
  func.func @transform_3(%arg0: i32, %arg1: i32) -> (i32, i32) {
    %c0_i32 = arith.constant 0 : i32
    %c0_i32_0 = arith.constant 0 : i32
    %c0_i32_1 = arith.constant 0 : i32
    return %c0_i32, %c0_i32_0 : i32, i32
  }
  func.func @transform_4(%arg0: i32, %arg1: i32) -> (i32, i32) {
    %c0_i32 = arith.constant 0 : i32
    %c0_i32_0 = arith.constant 0 : i32
    %c0_i32_1 = arith.constant 0 : i32
    return %c0_i32, %c0_i32_0 : i32, i32
  }
  func.func @transform_5(%arg0: i32, %arg1: i32) -> (i32, i32) {
    %c0_i32 = arith.constant 0 : i32
    %c0_i32_0 = arith.constant 0 : i32
    %c0_i32_1 = arith.constant 0 : i32
    return %c0_i32, %c0_i32_0 : i32, i32
  }
  func.func @transform_6(%arg0: i32, %arg1: i32) -> (i32, i32) {
    %c0_i32 = arith.constant 0 : i32
    %c0_i32_0 = arith.constant 0 : i32
    %c0_i32_1 = arith.constant 0 : i32
    return %c0_i32, %c0_i32_0 : i32, i32
  }
  func.func @transform_7(%arg0: i32, %arg1: i32) -> (i32, i32) {
    %c0_i32 = arith.constant 0 : i32
    %c0_i32_0 = arith.constant 0 : i32
    return %arg1, %c0_i32 : i32, i32
  }
  func.func @transform_8(%arg0: i32, %arg1: i32) -> (i32, i32) {
    %c0_i32 = arith.constant 0 : i32
    %c0_i32_0 = arith.constant 0 : i32
    return %arg1, %c0_i32 : i32, i32
  }
  func.func @transform_9(%arg0: i32, %arg1: i32) -> (i32, i32, i32) {
    %c0_i32 = arith.constant 0 : i32
    %c0_i32_0 = arith.constant 0 : i32
    return %arg0, %arg1, %c0_i32 : i32, i32, i32
  }
}

</mosaic_0001>

<llo_original>
// kernel: model_forward.1
$region0: #{model_forward.1}
  #allocation0 [shape = 'u32[]', space=smem, size = 0x4, offset = 0x4, fixed_abs, tag = 'smem constant byte address 0x4 - core index']
  #allocation1 [shape = 'u32[144,128]{1,0:T(1,128)}', space=vmem, size = 0x12000, scoped, tag = 'internal scratch']
  %s0 = inlined_call_operand.vmem [shape: f32[2,32,484], index: 0, kind: input, shape index: {}]
  %s1 = inlined_call_operand.hbm [shape: f32[1,484], index: 1, kind: input, shape index: {}]
  %s2 = inlined_call_operand.hbm [shape: f32[1,484], index: 2, kind: input, shape index: {}]
  %s3 = inlined_call_operand.hbm [shape: f32[32,32], index: 3, kind: input, shape index: {}]
  %s4 = inlined_call_operand.vmem [shape: f32[32,1], index: 4, kind: input, shape index: {}]
  %s5 = inlined_call_operand.hbm [shape: f32[32,32], index: 5, kind: input, shape index: {}]
  %s6 = inlined_call_operand.vmem [shape: f32[32,1], index: 6, kind: input, shape index: {}]
  %s7 = inlined_call_operand.vmem [shape: f32[2048,32], index: 7, kind: input, shape index: {}]
  %s8 = inlined_call_operand.vmem [shape: f32[2048,1], index: 8, kind: input, shape index: {}]
  %s9 = inlined_call_operand.vmem [shape: f32[2,2048,484], index: 9, kind: output, shape index: {}]
  %s10 = sld [smem:[#allocation0]]
  $region85: #{model_forward.1} parent=0
    _
  %s12 = ssub.s32 1, %s10
  %s13 = scalar_select 0, %s12, %s10
  $region1: #{model_forward.1} parent=0
    #allocation2 [shape = 'u8[2048]{0}', space=vmem, size = 0x800, scoped, tag = 'input window, operand 1, single buffered']
    #allocation3 [shape = 's32[2]{0}', space=sflag, size = 0x8, scoped, tag = 'scoped memory for model_forward.1']
    #allocation4 [shape = 'u8[2048]{0}', space=vmem, size = 0x800, scoped, tag = 'input window, operand 2, single buffered']
    #allocation5 [shape = 's32[1]{0}', space=sflag, size = 0x4, scoped, tag = 'scoped memory for model_forward.1']
    #allocation6 [shape = 'u8[16384]{0}', space=vmem, size = 0x4000, scoped, tag = 'input window, operand 3, single buffered']
    #allocation7 [shape = 'u8[16384]{0}', space=vmem, size = 0x4000, scoped, tag = 'input window, operand 5, single buffered']
    #allocation8 [shape = 's32[1]{0}', space=sflag, size = 0x4, scoped, tag = 'scoped memory for model_forward.1']
    %14 = vsyncpa [#allocation3], 0
    %15 = vsyncpa [#allocation5], 0
    %16 = vsyncpa [#allocation8], 0
    loop: start=0, step=1, limit=10
    $region2: #{model_forward.1} parent=1 // loop_pre_header
      _
    $region3: #{model_forward.1} parent=1 // loop_header
      %s18 = sphi 0, %s22
      %p19 = scmp.ge.s32.totalorder %s18, 10
      %s25 = sphi 0, %s37
      %s26 = sphi 0, %s33
      %s27 = sphi 0, %s25
      %s28 = sphi 0, %s26
      %s29 = sphi 0, %s27
      %s30 = sphi 0, %s28
      %s40 = sphi 0, %s42
      %s43 = sphi 0, %s40
      %s44 = sphi 0, %s43
      %s60 = sphi 0, %s44
      %s64 = sphi 0, %s64
      %s66 = sphi 0, %s64
      %s67 = sphi 0, %s66
      %s81 = sphi 0, %s67
      %s85 = sphi 0, %s85
      %s87 = sphi 0, %s85
      %s88 = sphi 0, %s87
      %s102 = sphi 0, %s88
      %s106 = sphi 0, %s106
      %s108 = sphi 0, %s106
      %s109 = sphi 0, %s108
      %s123 = sphi 0, %s109
      %s127 = sphi 0, %s127
      %s129 = sphi 0, %s127
      %s130 = sphi 0, %s129
      %s144 = sphi 0, %s130
      %s148 = sphi 0, %s148
      %s150 = sphi 0, %s148
      %s151 = sphi 0, %s150
      %s165 = sphi 0, %s151
      %s169 = sphi 0, %s169
      %s171 = sphi 0, %s169
      %s172 = sphi 0, %s171
      %s186 = sphi 0, %s172
      %s192 = sphi 0, %s194
      %s195 = sphi 0, %s192
      %s196 = sphi 0, %s195
      %s212 = sphi 0, %s196
      %s218 = sphi 0, %s220
      %s221 = sphi 0, %s218
      %s222 = sphi 0, %s221
      %s238 = sphi 0, %s222
      %s246 = sphi 0, %s248
      %s249 = sphi 0, %s246
      %s250 = sphi 0, %s249
      %s266 = sphi 0, %s250
    $region4: #{model_forward.1} parent=1 // loop_header_branch
      %21 = sbr.rel (%p19) target = $region8
    $region5: #{model_forward.1} parent=1 // loop_body
      %s23 = ssub.s32 %s18, 1
      %s24 = ssub.s32 %s18, 2
      %s31 = sadd.s32 1, %s26
      %p32 = scmp.ge.s32.totalorder %s31, 4
      %s33 = scalar_select %p32, 0, %s31
      %s34 = sadd.s32 1, %s25
      %s35 = scalar_select %p32, %s34, %s25
      %p36 = scmp.ge.s32.totalorder %s35, 2
      %s37 = scalar_select %p36, 0, %s35
      %s38 = ssub.s32 %s25, %s37
      %p39 = scmp.eq.s32.totalorder %s38, 0
      %s41 = sadd.s32 %s40, 1
      %s42 = scalar_select %p39, %s40, %s41
      %p45 = pneg %p39
      %p46 = scmp.eq.s32.totalorder %s18, 7
      %p47 = por %p45, %p46
      %p48 = scmp.ne.s32.totalorder %s40, %s43
      %p49 = scmp.eq.s32.totalorder %s18, 0
      %p50 = por %p48, %p49
      %p51 = scmp.ne.s32.totalorder %s40, %s43
      %p52 = scmp.eq.s32.totalorder %s23, 7
      %p53 = por %p51, %p52
      %p54 = scmp.ne.s32.totalorder %s43, %s44
      %p55 = scmp.eq.s32.totalorder %s23, 0
      %p56 = por %p54, %p55
      %p57 = scmp.ne.s32.totalorder %s43, %s44
      %p58 = scmp.eq.s32.totalorder %s24, 7
      %p59 = por %p57, %p58
      %p61 = scmp.ne.s32.totalorder %s44, %s60
      %p62 = scmp.eq.s32.totalorder %s24, 0
      %p63 = por %p61, %p62
      %s65 = sadd.s32 %s64, 1
      %p68 = scmp.eq.s32.totalorder %s18, 7
      %p69 = scmp.ne.s32.totalorder %s64, %s66
      %p70 = scmp.eq.s32.totalorder %s18, 0
      %p71 = por %p69, %p70
      %p72 = scmp.ne.s32.totalorder %s64, %s66
      %p73 = scmp.eq.s32.totalorder %s23, 7
      %p74 = por %p72, %p73
      %p75 = scmp.ne.s32.totalorder %s66, %s67
      %p76 = scmp.eq.s32.totalorder %s23, 0
      %p77 = por %p75, %p76
      %p78 = scmp.ne.s32.totalorder %s66, %s67
      %p79 = scmp.eq.s32.totalorder %s24, 7
      %p80 = por %p78, %p79
      %p82 = scmp.ne.s32.totalorder %s67, %s81
      %p83 = scmp.eq.s32.totalorder %s24, 0
      %p84 = por %p82, %p83
      %s86 = sadd.s32 %s85, 1
      %p89 = scmp.eq.s32.totalorder %s18, 7
      %p90 = scmp.ne.s32.totalorder %s85, %s87
      %p91 = scmp.eq.s32.totalorder %s18, 0
      %p92 = por %p90, %p91
      %p93 = scmp.ne.s32.totalorder %s85, %s87
      %p94 = scmp.eq.s32.totalorder %s23, 7
      %p95 = por %p93, %p94
      %p96 = scmp.ne.s32.totalorder %s87, %s88
      %p97 = scmp.eq.s32.totalorder %s23, 0
      %p98 = por %p96, %p97
      %p99 = scmp.ne.s32.totalorder %s87, %s88
      %p100 = scmp.eq.s32.totalorder %s24, 7
      %p101 = por %p99, %p100
      %p103 = scmp.ne.s32.totalorder %s88, %s102
      %p104 = scmp.eq.s32.totalorder %s24, 0
      %p105 = por %p103, %p104
      %s107 = sadd.s32 %s106, 1
      %p110 = scmp.eq.s32.totalorder %s18, 7
      %p111 = scmp.ne.s32.totalorder %s106, %s108
      %p112 = scmp.eq.s32.totalorder %s18, 0
      %p113 = por %p111, %p112
      %p114 = scmp.ne.s32.totalorder %s106, %s108
      %p115 = scmp.eq.s32.totalorder %s23, 7
      %p116 = por %p114, %p115
      %p117 = scmp.ne.s32.totalorder %s108, %s109
      %p118 = scmp.eq.s32.totalorder %s23, 0
      %p119 = por %p117, %p118
      %p120 = scmp.ne.s32.totalorder %s108, %s109
      %p121 = scmp.eq.s32.totalorder %s24, 7
      %p122 = por %p120, %p121
      %p124 = scmp.ne.s32.totalorder %s109, %s123
      %p125 = scmp.eq.s32.totalorder %s24, 0
      %p126 = por %p124, %p125
      %s128 = sadd.s32 %s127, 1
      %p131 = scmp.eq.s32.totalorder %s18, 7
      %p132 = scmp.ne.s32.totalorder %s127, %s129
      %p133 = scmp.eq.s32.totalorder %s18, 0
      %p134 = por %p132, %p133
      %p135 = scmp.ne.s32.totalorder %s127, %s129
      %p136 = scmp.eq.s32.totalorder %s23, 7
      %p137 = por %p135, %p136
      %p138 = scmp.ne.s32.totalorder %s129, %s130
      %p139 = scmp.eq.s32.totalorder %s23, 0
      %p140 = por %p138, %p139
      %p141 = scmp.ne.s32.totalorder %s129, %s130
      %p142 = scmp.eq.s32.totalorder %s24, 7
      %p143 = por %p141, %p142
      %p145 = scmp.ne.s32.totalorder %s130, %s144
      %p146 = scmp.eq.s32.totalorder %s24, 0
      %p147 = por %p145, %p146
      %s149 = sadd.s32 %s148, 1
      %p152 = scmp.eq.s32.totalorder %s18, 7
      %p153 = scmp.ne.s32.totalorder %s148, %s150
      %p154 = scmp.eq.s32.totalorder %s18, 0
      %p155 = por %p153, %p154
      %p156 = scmp.ne.s32.totalorder %s148, %s150
      %p157 = scmp.eq.s32.totalorder %s23, 7
      %p158 = por %p156, %p157
      %p159 = scmp.ne.s32.totalorder %s150, %s151
      %p160 = scmp.eq.s32.totalorder %s23, 0
      %p161 = por %p159, %p160
      %p162 = scmp.ne.s32.totalorder %s150, %s151
      %p163 = scmp.eq.s32.totalorder %s24, 7
      %p164 = por %p162, %p163
      %p166 = scmp.ne.s32.totalorder %s151, %s165
      %p167 = scmp.eq.s32.totalorder %s24, 0
      %p168 = por %p166, %p167
      %s170 = sadd.s32 %s169, 1
      %p173 = scmp.eq.s32.totalorder %s18, 7
      %p174 = scmp.ne.s32.totalorder %s169, %s171
      %p175 = scmp.eq.s32.totalorder %s18, 0
      %p176 = por %p174, %p175
      %p177 = scmp.ne.s32.totalorder %s169, %s171
      %p178 = scmp.eq.s32.totalorder %s23, 7
      %p179 = por %p177, %p178
      %p180 = scmp.ne.s32.totalorder %s171, %s172
      %p181 = scmp.eq.s32.totalorder %s23, 0
      %p182 = por %p180, %p181
      %p183 = scmp.ne.s32.totalorder %s171, %s172
      %p184 = scmp.eq.s32.totalorder %s24, 7
      %p185 = por %p183, %p184
      %p187 = scmp.ne.s32.totalorder %s172, %s186
      %p188 = scmp.eq.s32.totalorder %s24, 0
      %p189 = por %p187, %p188
      %s190 = ssub.s32 %s26, %s33
      %p191 = scmp.eq.s32.totalorder %s190, 0
      %s193 = sadd.s32 %s192, 1
      %s194 = scalar_select %p191, %s192, %s193
      %p197 = pneg %p191
      %p198 = scmp.eq.s32.totalorder %s18, 7
      %p199 = por %p197, %p198
      %p200 = scmp.ne.s32.totalorder %s192, %s195
      %p201 = scmp.eq.s32.totalorder %s18, 0
      %p202 = por %p200, %p201
      %p203 = scmp.ne.s32.totalorder %s192, %s195
      %p204 = scmp.eq.s32.totalorder %s23, 7
      %p205 = por %p203, %p204
      %p206 = scmp.ne.s32.totalorder %s195, %s196
      %p207 = scmp.eq.s32.totalorder %s23, 0
      %p208 = por %p206, %p207
      %p209 = scmp.ne.s32.totalorder %s195, %s196
      %p210 = scmp.eq.s32.totalorder %s24, 7
      %p211 = por %p209, %p210
      %p213 = scmp.ne.s32.totalorder %s196, %s212
      %p214 = scmp.eq.s32.totalorder %s24, 0
      %p215 = por %p213, %p214
      %s216 = ssub.s32 %s26, %s33
      %p217 = scmp.eq.s32.totalorder %s216, 0
      %s219 = sadd.s32 %s218, 1
      %s220 = scalar_select %p217, %s218, %s219
      %p223 = pneg %p217
      %p224 = scmp.eq.s32.totalorder %s18, 7
      %p225 = por %p223, %p224
      %p226 = scmp.ne.s32.totalorder %s218, %s221
      %p227 = scmp.eq.s32.totalorder %s18, 0
      %p228 = por %p226, %p227
      %p229 = scmp.ne.s32.totalorder %s218, %s221
      %p230 = scmp.eq.s32.totalorder %s23, 7
      %p231 = por %p229, %p230
      %p232 = scmp.ne.s32.totalorder %s221, %s222
      %p233 = scmp.eq.s32.totalorder %s23, 0
      %p234 = por %p232, %p233
      %p235 = scmp.ne.s32.totalorder %s221, %s222
      %p236 = scmp.eq.s32.totalorder %s24, 7
      %p237 = por %p235, %p236
      %p239 = scmp.ne.s32.totalorder %s222, %s238
      %p240 = scmp.eq.s32.totalorder %s24, 0
      %p241 = por %p239, %p240
      %s242 = ssub.s32 %s25, %s37
      %s243 = ssub.s32 %s26, %s33
      %s244 = sor.u32 %s242, %s243
      %p245 = scmp.eq.s32.totalorder %s244, 0
      %s247 = sadd.s32 %s246, 1
      %s248 = scalar_select %p245, %s246, %s247
      %p251 = pneg %p245
      %p252 = scmp.eq.s32.totalorder %s18, 7
      %p253 = por %p251, %p252
      %p254 = scmp.ne.s32.totalorder %s246, %s249
      %p255 = scmp.eq.s32.totalorder %s18, 0
      %p256 = por %p254, %p255
      %p257 = scmp.ne.s32.totalorder %s246, %s249
      %p258 = scmp.eq.s32.totalorder %s23, 7
      %p259 = por %p257, %p258
      %p260 = scmp.ne.s32.totalorder %s249, %s250
      %p261 = scmp.eq.s32.totalorder %s23, 0
      %p262 = por %p260, %p261
      %p263 = scmp.ne.s32.totalorder %s249, %s250
      %p264 = scmp.eq.s32.totalorder %s24, 7
      %p265 = por %p263, %p264
      %p267 = scmp.ne.s32.totalorder %s250, %s266
      %p268 = scmp.eq.s32.totalorder %s24, 0
      %p269 = por %p267, %p268
      %p270 = scmp.le.s32.totalorder 1, %s18
      %p271 = scmp.lt.s32.totalorder %s18, 9
      %p272 = pnand %p270, %p271
      %p273 = pneg %p272
      // Predicated region
      $region9: #{model_forward.1} parent=5 // pred_check
        _
      $region10: #{model_forward.1} parent=5 // pred_check_branch
        %275 = sbr.rel (%p272) target = $region12
      $region11: #{model_forward.1} parent=5 // pred_region
        %s276 = ssub.s32 %s18, 1
        // Predicated region
        $region13: #{model_forward.1} parent=11 // pred_check
          %p277 = pneg %p77
        $region14: #{model_forward.1} parent=11 // pred_check_branch
          %279 = sbr.rel (%p277) target = $region16
        $region15: #{model_forward.1} parent=11 // pred_region
          %s281 = ssub.s32 64, 64
          %282 = vsyncadd [#allocation3], %s281
          %s284 = sshll.u32 [#allocation2], 4
          %s285 = int_to_ptr.vmem [resolvable:$true] %s284
          %287 = dma.hbm_to_vmem [thread:$0]  %s1, 64, %s285, [#allocation3]
        $region16: #{model_forward.1} parent=11 // pred_fallthru
          _
        // Predicated region
        $region17: #{model_forward.1} parent=11 // pred_check
          %p288 = pneg %p98
        $region18: #{model_forward.1} parent=11 // pred_check_branch
          %290 = sbr.rel (%p288) target = $region20
        $region19: #{model_forward.1} parent=11 // pred_region
          %s292 = ssub.s32 64, 64
          %293 = vsyncadd [#allocation5], %s292
          %s295 = sshll.u32 [#allocation4], 4
          %s296 = int_to_ptr.vmem [resolvable:$true] %s295
          %298 = dma.hbm_to_vmem [thread:$0]  %s2, 64, %s296, [#allocation5]
        $region20: #{model_forward.1} parent=11 // pred_fallthru
          _
        // Predicated region
        $region21: #{model_forward.1} parent=11 // pred_check
          %p299 = pneg %p119
        $region22: #{model_forward.1} parent=11 // pred_check_branch
          %301 = sbr.rel (%p299) target = $region24
        $region23: #{model_forward.1} parent=11 // pred_region
          %s303 = ssub.s32 512, 512
          %304 = vsyncadd [#allocation5], %s303
          %s305 = sshll.u32 [#allocation6], 4
          %s306 = int_to_ptr.vmem [resolvable:$true] %s305
          %311 = dma.hbm_to_vmem [thread:$0]  %s3, 512, %s306, [#allocation5], 128, 128, 8
        $region24: #{model_forward.1} parent=11 // pred_fallthru
          _
        // Predicated region
        $region25: #{model_forward.1} parent=11 // pred_check
          %p312 = pneg %p140
        $region26: #{model_forward.1} parent=11 // pred_check_branch
          %314 = sbr.rel (%p312) target = $region28
        $region27: #{model_forward.1} parent=11 // pred_region
          _
        $region28: #{model_forward.1} parent=11 // pred_fallthru
          _
        // Predicated region
        $region29: #{model_forward.1} parent=11 // pred_check
          %p315 = pneg %p161
        $region30: #{model_forward.1} parent=11 // pred_check_branch
          %317 = sbr.rel (%p315) target = $region32
        $region31: #{model_forward.1} parent=11 // pred_region
          %s319 = ssub.s32 512, 512
          %320 = vsyncadd [#allocation8], %s319
          %s321 = sshll.u32 [#allocation7], 4
          %s322 = int_to_ptr.vmem [resolvable:$true] %s321
          %327 = dma.hbm_to_vmem [thread:$0]  %s5, 512, %s322, [#allocation8], 128, 128, 8
        $region32: #{model_forward.1} parent=11 // pred_fallthru
          _
        // Predicated region
        $region33: #{model_forward.1} parent=11 // pred_check
          %p328 = pneg %p182
        $region34: #{model_forward.1} parent=11 // pred_check_branch
          %330 = sbr.rel (%p328) target = $region36
        $region35: #{model_forward.1} parent=11 // pred_region
          _
        $region36: #{model_forward.1} parent=11 // pred_fallthru
          _
      $region12: #{model_forward.1} parent=5 // pred_fallthru
        _
      %p331 = scmp.lt.s32.totalorder %s18, 8
      // Predicated region
      $region37: #{model_forward.1} parent=5 // pred_check
        %p332 = pneg %p331
      $region38: #{model_forward.1} parent=5 // pred_check_branch
        %334 = sbr.rel (%p332) target = $region40
      $region39: #{model_forward.1} parent=5 // pred_region
        // Predicated region
        $region41: #{model_forward.1} parent=39 // pred_check
          %p335 = pneg %p50
        $region42: #{model_forward.1} parent=39 // pred_check_branch
          %337 = sbr.rel (%p335) target = $region44
        $region43: #{model_forward.1} parent=39 // pred_region
          %p338 = scmp.lt.s32.totalorder %s25, 1
          %s339 = scalar_select %p338, %s25, 1
          %s340 = smul.addr %s339, 16
          %s341 = smul.addr %s340, 8
          %s342 = scalar_lea.vmem %s0, %s341
        $region44: #{model_forward.1} parent=39 // pred_fallthru
          _
        // Predicated region
        $region45: #{model_forward.1} parent=39 // pred_check
          %p343 = pneg %p202
        $region46: #{model_forward.1} parent=39 // pred_check_branch
          %345 = sbr.rel (%p343) target = $region48
        $region47: #{model_forward.1} parent=39 // pred_region
          %s346 = smul.u32 64, %s26
          %p347 = scmp.lt.s32.totalorder %s346, 255
          %s348 = scalar_select %p347, %s346, 255
          %s349 = smul.addr %s348, 8
          %s350 = scalar_lea.vmem %s7, %s349
          %s351 = smul.u32 64, %s26
        $region48: #{model_forward.1} parent=39 // pred_fallthru
          _
        // Predicated region
        $region49: #{model_forward.1} parent=39 // pred_check
          %p352 = pneg %p228
        $region50: #{model_forward.1} parent=39 // pred_check_branch
          %354 = sbr.rel (%p352) target = $region52
        $region51: #{model_forward.1} parent=39 // pred_region
          %s355 = smul.u32 64, %s26
          %p356 = scmp.lt.s32.totalorder %s355, 255
          %s357 = scalar_select %p356, %s355, 255
          %s358 = smul.addr %s357, 8
          %s359 = scalar_lea.vmem %s8, %s358
          %s360 = smul.u32 64, %s26
        $region52: #{model_forward.1} parent=39 // pred_fallthru
          _
      $region40: #{model_forward.1} parent=5 // pred_fallthru
        _
      %p361 = scmp.le.s32.totalorder 1, %s18
      %p362 = scmp.lt.s32.totalorder %s18, 9
      %p363 = pnand %p361, %p362
      %p364 = pneg %p363
      // Predicated region
      $region53: #{model_forward.1} parent=5 // pred_check
        _
      $region54: #{model_forward.1} parent=5 // pred_check_branch
        %366 = sbr.rel (%p363) target = $region56
      $region55: #{model_forward.1} parent=5 // pred_region
        %s367 = ssub.s32 %s18, 1
        // Predicated region
        $region57: #{model_forward.1} parent=55 // pred_check
          %p368 = pneg %p77
        $region58: #{model_forward.1} parent=55 // pred_check_branch
          %370 = sbr.rel (%p368) target = $region60
        $region59: #{model_forward.1} parent=55 // pred_region
          %371 = dma.done [#allocation3], 64
        $region60: #{model_forward.1} parent=55 // pred_fallthru
          _
        // Predicated region
        $region61: #{model_forward.1} parent=55 // pred_check
          %p372 = pneg %p98
        $region62: #{model_forward.1} parent=55 // pred_check_branch
          %374 = sbr.rel (%p372) target = $region64
        $region63: #{model_forward.1} parent=55 // pred_region
          %375 = dma.done [#allocation5], 64
        $region64: #{model_forward.1} parent=55 // pred_fallthru
          _
        // Predicated region
        $region65: #{model_forward.1} parent=55 // pred_check
          %p376 = pneg %p119
        $region66: #{model_forward.1} parent=55 // pred_check_branch
          %378 = sbr.rel (%p376) target = $region68
        $region67: #{model_forward.1} parent=55 // pred_region
          %379 = dma.done [#allocation5], 512
        $region68: #{model_forward.1} parent=55 // pred_fallthru
          _
        // Predicated region
        $region69: #{model_forward.1} parent=55 // pred_check
          %p380 = pneg %p161
        $region70: #{model_forward.1} parent=55 // pred_check_branch
          %382 = sbr.rel (%p380) target = $region72
        $region71: #{model_forward.1} parent=55 // pred_region
          %383 = dma.done [#allocation8], 512
        $region72: #{model_forward.1} parent=55 // pred_fallthru
          _
        %p384 = scmp.lt.s32.totalorder %s27, 1
        %s385 = scalar_select %p384, %s27, 1
        %s386 = smul.addr %s385, 16
        %s387 = smul.addr %s386, 8
        %s388 = scalar_lea.vmem %s0, %s387
        %p389 = pneg %p56
        %p390 = pneg %p53
        %p391 = pneg %p77
        %p392 = pneg %p74
        %p393 = pneg %p98
        %p394 = pneg %p95
        %p395 = pneg %p119
        %p396 = pneg %p116
        %p397 = pneg %p140
        %p398 = pneg %p137
        %p399 = pneg %p161
        %p400 = pneg %p158
        %p401 = pneg %p182
        %p402 = pneg %p179
        %s403 = smul.u32 64, %s28
        %p404 = scmp.lt.s32.totalorder %s403, 255
        %s405 = scalar_select %p404, %s403, 255
        %s406 = smul.addr %s405, 8
        %s407 = scalar_lea.vmem %s7, %s406
        %p408 = pneg %p208
        %p409 = pneg %p205
        %s410 = smul.u32 64, %s28
        %p411 = scmp.lt.s32.totalorder %s410, 255
        %s412 = scalar_select %p411, %s410, 255
        %s413 = smul.addr %s412, 8
        %s414 = scalar_lea.vmem %s8, %s413
        %p415 = pneg %p234
        %p416 = pneg %p231
        %p417 = pneg %p262
        %p418 = pneg %p259
        %s419 = smul.u32 64, %s28
        %p420 = scmp.lt.s32.totalorder %s27, 1
        %s421 = scalar_select %p420, %s27, 1
        %p422 = scmp.lt.s32.totalorder %s419, 255
        %s423 = scalar_select %p422, %s419, 255
        %s424 = smul.addr %s423, 4
        %s425 = smul.addr %s421, 1024
        %s426 = sadd.s32 %s424, %s425
        %s427 = smul.addr %s426, 8
        %s428 = scalar_lea.vmem %s9, %s427
        %p429 = scmp.lt.s32.totalorder %s27, 1
        %s430 = scalar_select %p429, %s27, 1
        %s431 = smul.addr %s430, 16
        %s432 = smul.addr %s431, 8
        %s433 = scalar_lea.vmem %s0, %s432
        %s434 = smul.u32 64, %s28
        %p435 = scmp.lt.s32.totalorder %s434, 255
        %s436 = scalar_select %p435, %s434, 255
        %s437 = smul.addr %s436, 8
        %s438 = scalar_lea.vmem %s7, %s437
        %s439 = smul.u32 64, %s28
        %s440 = smul.u32 64, %s28
        %p441 = scmp.lt.s32.totalorder %s440, 255
        %s442 = scalar_select %p441, %s440, 255
        %s443 = smul.addr %s442, 8
        %s444 = scalar_lea.vmem %s8, %s443
        %s445 = smul.u32 64, %s28
        %s446 = smul.u32 64, %s28
        %p447 = scmp.lt.s32.totalorder %s27, 1
        %s448 = scalar_select %p447, %s27, 1
        %p449 = scmp.lt.s32.totalorder %s446, 255
        %s450 = scalar_select %p449, %s446, 255
        %s451 = smul.addr %s450, 4
        %s452 = smul.addr %s448, 1024
        %s453 = sadd.s32 %s451, %s452
        %s454 = smul.addr %s453, 8
        %s455 = scalar_lea.vmem %s9, %s454
        %s456 = smul.u32 64, %s28
        %v457 = vld [vmem:[%s433] sm:$0xff]
        %v458 = vld [vmem:[%s433 + $0x8] sm:$0xff]
        %v459 = vld [vmem:[%s433 + $0x10] sm:$0xff]
        %v460 = vld [vmem:[%s433 + $0x18] sm:$0xff]
        %v461 = vld [vmem:[%s433 + $0x20] sm:$0xff]
        %v462 = vld [vmem:[%s433 + $0x28] sm:$0xff]
        %v463 = vld [vmem:[%s433 + $0x30] sm:$0xff]
        %v464 = vld [vmem:[%s433 + $0x38] sm:$0xff]
        %v465 = vld [vmem:[%s433 + $0x40] sm:$0xff]
        %v466 = vld [vmem:[%s433 + $0x48] sm:$0xff]
        %v467 = vld [vmem:[%s433 + $0x50] sm:$0xff]
        %v468 = vld [vmem:[%s433 + $0x58] sm:$0xff]
        %v469 = vld [vmem:[%s433 + $0x60] sm:$0xff]
        %v470 = vld [vmem:[%s433 + $0x68] sm:$0xff]
        %v471 = vld [vmem:[%s433 + $0x70] sm:$0xff]
        %v472 = vld [vmem:[%s433 + $0x78] sm:$0xff]
        %v473 = vld [vmem:[#allocation6] sm:$0xff]
        %v474 = vld [vmem:[#allocation6 + $0x8] sm:$0xff]
        %v475 = vld [vmem:[#allocation6 + $0x10] sm:$0xff]
        %v476 = vld [vmem:[#allocation6 + $0x18] sm:$0xff]
        %v477 = vld [vmem:[%s4] sm:$0xff]
        %v478 = vld [vmem:[%s4 + $0x8] sm:$0xff]
        %v479 = vld [vmem:[%s4 + $0x10] sm:$0xff]
        %v480 = vld [vmem:[%s4 + $0x18] sm:$0xff]
        %482 = vset.pattern.permute.xlu0 0
        %483 = vperm.xlu0 %482, %v477
        %v484 = vpop.permute.xlu0 %483
        %487 = vset.pattern.permute.xlu0 0
        %488 = vperm.xlu0 %487, %v478
        %v489 = vpop.permute.xlu0 %488
        %492 = vset.pattern.permute.xlu0 0
        %493 = vperm.xlu0 %492, %v479
        %v494 = vpop.permute.xlu0 %493
        %497 = vset.pattern.permute.xlu0 0
        %498 = vperm.xlu0 %497, %v480
        %v499 = vpop.permute.xlu0 %498
        %vm501 = vcmask 261120
        %v503 = vsel %vm501, %v473, 0
        %v506 = vsel %vm501, %v474, 0
        %v509 = vsel %vm501, %v475, 0
        %v512 = vsel %vm501, %v476, 0
        %514 = vmatprep.subr.mxu0 %v458
        %515 = vmatpush1.msra.mxu0 %v457
        %516 = vmatprep.subr.mxu0 %v462
        %517 = vmatpush1.msra.mxu0 %v461
        %518 = vmatprep.subr.mxu0 %v466
        %519 = vmatpush1.msra.mxu0 %v465
        %520 = vmatprep.subr.mxu0 %v470
        %521 = vmatpush1.msra.mxu0 %v469
        %522 = vmatprep.subr.mxu0 0.0
        %523 = vmatpush1.msra.mxu0 0.0
        %524 = vmatprep.subr.mxu0 0.0
        %525 = vmatpush1.msra.mxu0 0.0
        %526 = vmatprep.subr.mxu0 0.0
        %527 = vmatpush1.msra.mxu0 0.0
        %528 = vmatprep.subr.mxu0 0.0
        %529 = vmatpush1.msra.mxu0 0.0
        %530 = vmatprep.subr.mxu0 0.0
        %531 = vmatpush1.msra.mxu0 0.0
        %532 = vmatprep.subr.mxu0 0.0
        %533 = vmatpush1.msra.mxu0 0.0
        %534 = vmatprep.subr.mxu0 0.0
        %535 = vmatpush1.msra.mxu0 0.0
        %536 = vmatprep.subr.mxu0 0.0
        %537 = vmatpush1.msra.mxu0 0.0
        %538 = vmatprep.subr.mxu0 0.0
        %539 = vmatpush1.msra.mxu0 0.0
        %540 = vmatprep.subr.mxu0 0.0
        %541 = vmatpush1.msra.mxu0 0.0
        %542 = vmatprep.subr.mxu0 0.0
        %543 = vmatpush1.msra.mxu0 0.0
        %544 = vmatprep.subr.mxu0 0.0
        %545 = vmatpush1.msra.mxu0 0.0
        %546 = vmatprep.subr.mxu0 0.0
        %547 = vmatpush1.msra.mxu0 0.0
        %548 = vmatprep.subr.mxu0 0.0
        %549 = vmatpush1.msra.mxu0 0.0
        %550 = vmatprep.subr.mxu0 0.0
        %551 = vmatpush1.msra.mxu0 0.0
        %552 = vmatprep.subr.mxu0 0.0
        %553 = vmatpush1.msra.mxu0 0.0
        %554 = vmatprep.subr.mxu0 0.0
        %555 = vmatpush1.msra.mxu0 0.0
        %556 = vmatprep.subr.mxu0 0.0
        %557 = vmatpush1.msra.mxu0 0.0
        %558 = vmatprep.subr.mxu0 0.0
        %559 = vmatpush1.msra.mxu0 0.0
        %560 = vmatprep.subr.mxu0 0.0
        %561 = vmatpush1.msra.mxu0 0.0
        %562 = vmatprep.subr.mxu0 0.0
        %563 = vmatpush1.msra.mxu0 0.0
        %564 = vmatprep.subr.mxu0 0.0
        %565 = vmatpush1.msra.mxu0 0.0
        %566 = vmatprep.subr.mxu0 0.0
        %567 = vmatpush1.msra.mxu0 0.0
        %568 = vmatprep.subr.mxu0 0.0
        %569 = vmatpush1.msra.mxu0 0.0
        %570 = vmatprep.subr.mxu0 0.0
        %571 = vmatpush1.msra.mxu0 0.0
        %572 = vmatprep.subr.mxu0 0.0
        %573 = vmatpush1.msra.mxu0 0.0
        %574 = vmatprep.subr.mxu0 0.0
        %575 = vmatpush1.msra.mxu0 0.0
        %576 = vmatprep.subr.mxu0 0.0
        %577 = vmatpush1.msra.mxu0 0.0
        %578 = vmatprep.mubr.f32.mxu0 0.0
        %579 = vmatmul.mubr.f32.gmra.mrb[0].mxu0 %v503
        %v580 = vpop.f32.mrb[0].mxu0
        %v581 = vadd.f32 %v484, %v580
        %v582 = vpop.f32.mrb[0].mxu0
        %v583 = vadd.f32 %v484, %v582
        %584 = vmatprep.mubr.f32.mxu0 0.0
        %585 = vmatmul.mubr.f32.gmra.mrb[0].mxu0 %v506
        %v586 = vpop.f32.mrb[0].mxu0
        %v587 = vadd.f32 %v489, %v586
        %v588 = vpop.f32.mrb[0].mxu0
        %v589 = vadd.f32 %v489, %v588
        %590 = vmatprep.mubr.f32.mxu0 0.0
        %591 = vmatmul.mubr.f32.gmra.mrb[0].mxu0 %v509
        %v592 = vpop.f32.mrb[0].mxu0
        %v593 = vadd.f32 %v494, %v592
        %v594 = vpop.f32.mrb[0].mxu0
        %v595 = vadd.f32 %v494, %v594
        %596 = vmatprep.mubr.f32.mxu0 0.0
        %597 = vmatmul.mubr.f32.gmra.mrb[0].mxu0 %v512
        %v598 = vpop.f32.mrb[0].mxu0
        %v599 = vadd.f32 %v499, %v598
        %v600 = vpop.f32.mrb[0].mxu0
        %v601 = vadd.f32 %v499, %v600
        %602 = vdwg.mxu0
        %603 = vmatprep.subr.mxu0 %v460
        %604 = vmatpush1.msra.mxu0 %v459
        %605 = vmatprep.subr.mxu0 %v464
        %606 = vmatpush1.msra.mxu0 %v463
        %607 = vmatprep.subr.mxu0 %v468
        %608 = vmatpush1.msra.mxu0 %v467
        %609 = vmatprep.subr.mxu0 %v472
        %610 = vmatpush1.msra.mxu0 %v471
        %611 = vmatprep.subr.mxu0 0.0
        %612 = vmatpush1.msra.mxu0 0.0
        %613 = vmatprep.subr.mxu0 0.0
        %614 = vmatpush1.msra.mxu0 0.0
        %615 = vmatprep.subr.mxu0 0.0
        %616 = vmatpush1.msra.mxu0 0.0
        %617 = vmatprep.subr.mxu0 0.0
        %618 = vmatpush1.msra.mxu0 0.0
        %619 = vmatprep.subr.mxu0 0.0
        %620 = vmatpush1.msra.mxu0 0.0
        %621 = vmatprep.subr.mxu0 0.0
        %622 = vmatpush1.msra.mxu0 0.0
        %623 = vmatprep.subr.mxu0 0.0
        %624 = vmatpush1.msra.mxu0 0.0
        %625 = vmatprep.subr.mxu0 0.0
        %626 = vmatpush1.msra.mxu0 0.0
        %627 = vmatprep.subr.mxu0 0.0
        %628 = vmatpush1.msra.mxu0 0.0
        %629 = vmatprep.subr.mxu0 0.0
        %630 = vmatpush1.msra.mxu0 0.0
        %631 = vmatprep.subr.mxu0 0.0
        %632 = vmatpush1.msra.mxu0 0.0
        %633 = vmatprep.subr.mxu0 0.0
        %634 = vmatpush1.msra.mxu0 0.0
        %635 = vmatprep.subr.mxu0 0.0
        %636 = vmatpush1.msra.mxu0 0.0
        %637 = vmatprep.subr.mxu0 0.0
        %638 = vmatpush1.msra.mxu0 0.0
        %639 = vmatprep.subr.mxu0 0.0
        %640 = vmatpush1.msra.mxu0 0.0
        %641 = vmatprep.subr.mxu0 0.0
        %642 = vmatpush1.msra.mxu0 0.0
        %643 = vmatprep.subr.mxu0 0.0
        %644 = vmatpush1.msra.mxu0 0.0
        %645 = vmatprep.subr.mxu0 0.0
        %646 = vmatpush1.msra.mxu0 0.0
        %647 = vmatprep.subr.mxu0 0.0
        %648 = vmatpush1.msra.mxu0 0.0
        %649 = vmatprep.subr.mxu0 0.0
        %650 = vmatpush1.msra.mxu0 0.0
        %651 = vmatprep.subr.mxu0 0.0
        %652 = vmatpush1.msra.mxu0 0.0
        %653 = vmatprep.subr.mxu0 0.0
        %654 = vmatpush1.msra.mxu0 0.0
        %655 = vmatprep.subr.mxu0 0.0
        %656 = vmatpush1.msra.mxu0 0.0
        %657 = vmatprep.subr.mxu0 0.0
        %658 = vmatpush1.msra.mxu0 0.0
        %659 = vmatprep.subr.mxu0 0.0
        %660 = vmatpush1.msra.mxu0 0.0
        %661 = vmatprep.subr.mxu0 0.0
        %662 = vmatpush1.msra.mxu0 0.0
        %663 = vmatprep.subr.mxu0 0.0
        %664 = vmatpush1.msra.mxu0 0.0
        %665 = vmatprep.subr.mxu0 0.0
        %666 = vmatpush1.msra.mxu0 0.0
        %667 = vmatprep.mubr.f32.mxu0 0.0
        %668 = vmatmul.mubr.f32.gmra.mrb[0].mxu0 %v503
        %v669 = vpop.f32.mrb[0].mxu0
        %v670 = vadd.f32 %v484, %v669
        %v671 = vpop.f32.mrb[0].mxu0
        %v672 = vadd.f32 %v484, %v671
        %673 = vmatprep.mubr.f32.mxu0 0.0
        %674 = vmatmul.mubr.f32.gmra.mrb[0].mxu0 %v506
        %v675 = vpop.f32.mrb[0].mxu0
        %v676 = vadd.f32 %v489, %v675
        %v677 = vpop.f32.mrb[0].mxu0
        %v678 = vadd.f32 %v489, %v677
        %679 = vmatprep.mubr.f32.mxu0 0.0
        %680 = vmatmul.mubr.f32.gmra.mrb[0].mxu0 %v509
        %v681 = vpop.f32.mrb[0].mxu0
        %v682 = vadd.f32 %v494, %v681
        %v683 = vpop.f32.mrb[0].mxu0
        %v684 = vadd.f32 %v494, %v683
        %685 = vmatprep.mubr.f32.mxu0 0.0
        %686 = vmatmul.mubr.f32.gmra.mrb[0].mxu0 %v512
        %v687 = vpop.f32.mrb[0].mxu0
        %v688 = vadd.f32 %v499, %v687
        %v689 = vpop.f32.mrb[0].mxu0
        %v690 = vadd.f32 %v499, %v689
        %691 = vdwg.mxu0
        %v692 = vld [vmem:[#allocation2] sm:$0xf]
        %v694 = vlaneseq
        %v695 = vshrl.u32 %v694, 7
        %v696 = vsub.s32 0, %v695
        %v697 = vrot.slane %v692, %v696
        %v698 = vlaneseq
        %v699 = vshrl.u32 %v698, 7
        %v700 = vsub.s32 1, %v699
        %v701 = vrot.slane %v692, %v700
        %v702 = vlaneseq
        %v703 = vshrl.u32 %v702, 7
        %v704 = vsub.s32 2, %v703
        %v705 = vrot.slane %v692, %v704
        %v706 = vlaneseq
        %v707 = vshrl.u32 %v706, 7
        %v708 = vsub.s32 3, %v707
        %v709 = vrot.slane %v692, %v708
        %v714 = vmul.f32 %v581, %v697
        %v715 = vmul.f32 %v583, %v701
        %v716 = vmul.f32 %v670, %v705
        %v717 = vmul.f32 %v672, %v709
        %v718 = vmul.f32 %v587, %v697
        %v719 = vmul.f32 %v589, %v701
        %v720 = vmul.f32 %v676, %v705
        %v721 = vmul.f32 %v678, %v709
        %v722 = vmul.f32 %v593, %v697
        %v723 = vmul.f32 %v595, %v701
        %v724 = vmul.f32 %v682, %v705
        %v725 = vmul.f32 %v684, %v709
        %v726 = vmul.f32 %v599, %v697
        %v727 = vmul.f32 %v601, %v701
        %v728 = vmul.f32 %v688, %v705
        %v729 = vmul.f32 %v690, %v709
        %v730 = vld [vmem:[#allocation7] sm:$0xff]
        %v731 = vld [vmem:[#allocation7 + $0x8] sm:$0xff]
        %v732 = vld [vmem:[#allocation7 + $0x10] sm:$0xff]
        %v733 = vld [vmem:[#allocation7 + $0x18] sm:$0xff]
        %v734 = vld [vmem:[%s6] sm:$0xff]
        %v735 = vld [vmem:[%s6 + $0x8] sm:$0xff]
        %v736 = vld [vmem:[%s6 + $0x10] sm:$0xff]
        %v737 = vld [vmem:[%s6 + $0x18] sm:$0xff]
        %739 = vset.pattern.permute.xlu0 0
        %740 = vperm.xlu0 %739, %v734
        %v741 = vpop.permute.xlu0 %740
        %744 = vset.pattern.permute.xlu0 0
        %745 = vperm.xlu0 %744, %v735
        %v746 = vpop.permute.xlu0 %745
        %749 = vset.pattern.permute.xlu0 0
        %750 = vperm.xlu0 %749, %v736
        %v751 = vpop.permute.xlu0 %750
        %754 = vset.pattern.permute.xlu0 0
        %755 = vperm.xlu0 %754, %v737
        %v756 = vpop.permute.xlu0 %755
        %v759 = vsel %vm501, %v730, 0
        %v762 = vsel %vm501, %v731, 0
        %v765 = vsel %vm501, %v732, 0
        %v768 = vsel %vm501, %v733, 0
        %770 = vmatprep.subr.mxu0 %v715
        %771 = vmatpush1.msra.mxu0 %v714
        %772 = vmatprep.subr.mxu0 %v719
        %773 = vmatpush1.msra.mxu0 %v718
        %774 = vmatprep.subr.mxu0 %v723
        %775 = vmatpush1.msra.mxu0 %v722
        %776 = vmatprep.subr.mxu0 %v727
        %777 = vmatpush1.msra.mxu0 %v726
        %778 = vmatprep.subr.mxu0 0.0
        %779 = vmatpush1.msra.mxu0 0.0
        %780 = vmatprep.subr.mxu0 0.0
        %781 = vmatpush1.msra.mxu0 0.0
        %782 = vmatprep.subr.mxu0 0.0
        %783 = vmatpush1.msra.mxu0 0.0
        %784 = vmatprep.subr.mxu0 0.0
        %785 = vmatpush1.msra.mxu0 0.0
        %786 = vmatprep.subr.mxu0 0.0
        %787 = vmatpush1.msra.mxu0 0.0
        %788 = vmatprep.subr.mxu0 0.0
        %789 = vmatpush1.msra.mxu0 0.0
        %790 = vmatprep.subr.mxu0 0.0
        %791 = vmatpush1.msra.mxu0 0.0
        %792 = vmatprep.subr.mxu0 0.0
        %793 = vmatpush1.msra.mxu0 0.0
        %794 = vmatprep.subr.mxu0 0.0
        %795 = vmatpush1.msra.mxu0 0.0
        %796 = vmatprep.subr.mxu0 0.0
        %797 = vmatpush1.msra.mxu0 0.0
        %798 = vmatprep.subr.mxu0 0.0
        %799 = vmatpush1.msra.mxu0 0.0
        %800 = vmatprep.subr.mxu0 0.0
        %801 = vmatpush1.msra.mxu0 0.0
        %802 = vmatprep.subr.mxu0 0.0
        %803 = vmatpush1.msra.mxu0 0.0
        %804 = vmatprep.subr.mxu0 0.0
        %805 = vmatpush1.msra.mxu0 0.0
        %806 = vmatprep.subr.mxu0 0.0
        %807 = vmatpush1.msra.mxu0 0.0
        %808 = vmatprep.subr.mxu0 0.0
        %809 = vmatpush1.msra.mxu0 0.0
        %810 = vmatprep.subr.mxu0 0.0
        %811 = vmatpush1.msra.mxu0 0.0
        %812 = vmatprep.subr.mxu0 0.0
        %813 = vmatpush1.msra.mxu0 0.0
        %814 = vmatprep.subr.mxu0 0.0
        %815 = vmatpush1.msra.mxu0 0.0
        %816 = vmatprep.subr.mxu0 0.0
        %817 = vmatpush1.msra.mxu0 0.0
        %818 = vmatprep.subr.mxu0 0.0
        %819 = vmatpush1.msra.mxu0 0.0
        %820 = vmatprep.subr.mxu0 0.0
        %821 = vmatpush1.msra.mxu0 0.0
        %822 = vmatprep.subr.mxu0 0.0
        %823 = vmatpush1.msra.mxu0 0.0
        %824 = vmatprep.subr.mxu0 0.0
        %825 = vmatpush1.msra.mxu0 0.0
        %826 = vmatprep.subr.mxu0 0.0
        %827 = vmatpush1.msra.mxu0 0.0
        %828 = vmatprep.subr.mxu0 0.0
        %829 = vmatpush1.msra.mxu0 0.0
        %830 = vmatprep.subr.mxu0 0.0
        %831 = vmatpush1.msra.mxu0 0.0
        %832 = vmatprep.subr.mxu0 0.0
        %833 = vmatpush1.msra.mxu0 0.0
        %834 = vmatprep.mubr.f32.mxu0 0.0
        %835 = vmatmul.mubr.f32.gmra.mrb[0].mxu0 %v759
        %v836 = vpop.f32.mrb[0].mxu0
        %v837 = vadd.f32 %v741, %v836
        %v838 = vpop.f32.mrb[0].mxu0
        %v839 = vadd.f32 %v741, %v838
        %840 = vmatprep.mubr.f32.mxu0 0.0
        %841 = vmatmul.mubr.f32.gmra.mrb[0].mxu0 %v762
        %v842 = vpop.f32.mrb[0].mxu0
        %v843 = vadd.f32 %v746, %v842
        %v844 = vpop.f32.mrb[0].mxu0
        %v845 = vadd.f32 %v746, %v844
        %846 = vmatprep.mubr.f32.mxu0 0.0
        %847 = vmatmul.mubr.f32.gmra.mrb[0].mxu0 %v765
        %v848 = vpop.f32.mrb[0].mxu0
        %v849 = vadd.f32 %v751, %v848
        %v850 = vpop.f32.mrb[0].mxu0
        %v851 = vadd.f32 %v751, %v850
        %852 = vmatprep.mubr.f32.mxu0 0.0
        %853 = vmatmul.mubr.f32.gmra.mrb[0].mxu0 %v768
        %v854 = vpop.f32.mrb[0].mxu0
        %v855 = vadd.f32 %v756, %v854
        %v856 = vpop.f32.mrb[0].mxu0
        %v857 = vadd.f32 %v756, %v856
        %858 = vdwg.mxu0
        %859 = vmatprep.subr.mxu0 %v717
        %860 = vmatpush1.msra.mxu0 %v716
        %861 = vmatprep.subr.mxu0 %v721
        %862 = vmatpush1.msra.mxu0 %v720
        %863 = vmatprep.subr.mxu0 %v725
        %864 = vmatpush1.msra.mxu0 %v724
        %865 = vmatprep.subr.mxu0 %v729
        %866 = vmatpush1.msra.mxu0 %v728
        %867 = vmatprep.subr.mxu0 0.0
        %868 = vmatpush1.msra.mxu0 0.0
        %869 = vmatprep.subr.mxu0 0.0
        %870 = vmatpush1.msra.mxu0 0.0
        %871 = vmatprep.subr.mxu0 0.0
        %872 = vmatpush1.msra.mxu0 0.0
        %873 = vmatprep.subr.mxu0 0.0
        %874 = vmatpush1.msra.mxu0 0.0
        %875 = vmatprep.subr.mxu0 0.0
        %876 = vmatpush1.msra.mxu0 0.0
        %877 = vmatprep.subr.mxu0 0.0
        %878 = vmatpush1.msra.mxu0 0.0
        %879 = vmatprep.subr.mxu0 0.0
        %880 = vmatpush1.msra.mxu0 0.0
        %881 = vmatprep.subr.mxu0 0.0
        %882 = vmatpush1.msra.mxu0 0.0
        %883 = vmatprep.subr.mxu0 0.0
        %884 = vmatpush1.msra.mxu0 0.0
        %885 = vmatprep.subr.mxu0 0.0
        %886 = vmatpush1.msra.mxu0 0.0
        %887 = vmatprep.subr.mxu0 0.0
        %888 = vmatpush1.msra.mxu0 0.0
        %889 = vmatprep.subr.mxu0 0.0
        %890 = vmatpush1.msra.mxu0 0.0
        %891 = vmatprep.subr.mxu0 0.0
        %892 = vmatpush1.msra.mxu0 0.0
        %893 = vmatprep.subr.mxu0 0.0
        %894 = vmatpush1.msra.mxu0 0.0
        %895 = vmatprep.subr.mxu0 0.0
        %896 = vmatpush1.msra.mxu0 0.0
        %897 = vmatprep.subr.mxu0 0.0
        %898 = vmatpush1.msra.mxu0 0.0
        %899 = vmatprep.subr.mxu0 0.0
        %900 = vmatpush1.msra.mxu0 0.0
        %901 = vmatprep.subr.mxu0 0.0
        %902 = vmatpush1.msra.mxu0 0.0
        %903 = vmatprep.subr.mxu0 0.0
        %904 = vmatpush1.msra.mxu0 0.0
        %905 = vmatprep.subr.mxu0 0.0
        %906 = vmatpush1.msra.mxu0 0.0
        %907 = vmatprep.subr.mxu0 0.0
        %908 = vmatpush1.msra.mxu0 0.0
        %909 = vmatprep.subr.mxu0 0.0
        %910 = vmatpush1.msra.mxu0 0.0
        %911 = vmatprep.subr.mxu0 0.0
        %912 = vmatpush1.msra.mxu0 0.0
        %913 = vmatprep.subr.mxu0 0.0
        %914 = vmatpush1.msra.mxu0 0.0
        %915 = vmatprep.subr.mxu0 0.0
        %916 = vmatpush1.msra.mxu0 0.0
        %917 = vmatprep.subr.mxu0 0.0
        %918 = vmatpush1.msra.mxu0 0.0
        %919 = vmatprep.subr.mxu0 0.0
        %920 = vmatpush1.msra.mxu0 0.0
        %921 = vmatprep.subr.mxu0 0.0
        %922 = vmatpush1.msra.mxu0 0.0
        %923 = vmatprep.mubr.f32.mxu0 0.0
        %924 = vmatmul.mubr.f32.gmra.mrb[0].mxu0 %v759
        %v925 = vpop.f32.mrb[0].mxu0
        %v926 = vadd.f32 %v741, %v925
        %v927 = vpop.f32.mrb[0].mxu0
        %v928 = vadd.f32 %v741, %v927
        %929 = vmatprep.mubr.f32.mxu0 0.0
        %930 = vmatmul.mubr.f32.gmra.mrb[0].mxu0 %v762
        %v931 = vpop.f32.mrb[0].mxu0
        %v932 = vadd.f32 %v746, %v931
        %v933 = vpop.f32.mrb[0].mxu0
        %v934 = vadd.f32 %v746, %v933
        %935 = vmatprep.mubr.f32.mxu0 0.0
        %936 = vmatmul.mubr.f32.gmra.mrb[0].mxu0 %v765
        %v937 = vpop.f32.mrb[0].mxu0
        %v938 = vadd.f32 %v751, %v937
        %v939 = vpop.f32.mrb[0].mxu0
        %v940 = vadd.f32 %v751, %v939
        %941 = vmatprep.mubr.f32.mxu0 0.0
        %942 = vmatmul.mubr.f32.gmra.mrb[0].mxu0 %v768
        %v943 = vpop.f32.mrb[0].mxu0
        %v944 = vadd.f32 %v756, %v943
        %v945 = vpop.f32.mrb[0].mxu0
        %v946 = vadd.f32 %v756, %v945
        %947 = vdwg.mxu0
        %v948 = vld [vmem:[#allocation4] sm:$0xf]
        %v950 = vlaneseq
        %v951 = vshrl.u32 %v950, 7
        %v952 = vsub.s32 0, %v951
        %v953 = vrot.slane %v948, %v952
        %v954 = vlaneseq
        %v955 = vshrl.u32 %v954, 7
        %v956 = vsub.s32 1, %v955
        %v957 = vrot.slane %v948, %v956
        %v958 = vlaneseq
        %v959 = vshrl.u32 %v958, 7
        %v960 = vsub.s32 2, %v959
        %v961 = vrot.slane %v948, %v960
        %v962 = vlaneseq
        %v963 = vshrl.u32 %v962, 7
        %v964 = vsub.s32 3, %v963
        %v965 = vrot.slane %v948, %v964
        %v970 = vmul.f32 %v837, %v953
        %v971 = vmul.f32 %v839, %v957
        %v972 = vmul.f32 %v926, %v961
        %v973 = vmul.f32 %v928, %v965
        %v974 = vmul.f32 %v843, %v953
        %v975 = vmul.f32 %v845, %v957
        %v976 = vmul.f32 %v932, %v961
        %v977 = vmul.f32 %v934, %v965
        %v978 = vmul.f32 %v849, %v953
        %v979 = vmul.f32 %v851, %v957
        %v980 = vmul.f32 %v938, %v961
        %v981 = vmul.f32 %v940, %v965
        %v982 = vmul.f32 %v855, %v953
        %v983 = vmul.f32 %v857, %v957
        %v984 = vmul.f32 %v944, %v961
        %v985 = vmul.f32 %v946, %v965
        %v986 = vld [vmem:[%s438] sm:$0xff]
        %v987 = vld [vmem:[%s438 + $0x8] sm:$0xff]
        %v988 = vld [vmem:[%s438 + $0x10] sm:$0xff]
        %v989 = vld [vmem:[%s438 + $0x18] sm:$0xff]
        %v990 = vld [vmem:[%s438 + $0x20] sm:$0xff]
        %v991 = vld [vmem:[%s438 + $0x28] sm:$0xff]
        %v992 = vld [vmem:[%s438 + $0x30] sm:$0xff]
        %v993 = vld [vmem:[%s438 + $0x38] sm:$0xff]
        %v994 = vld [vmem:[%s438 + $0x40] sm:$0xff]
        %v995 = vld [vmem:[%s438 + $0x48] sm:$0xff]
        %v996 = vld [vmem:[%s438 + $0x50] sm:$0xff]
        %v997 = vld [vmem:[%s438 + $0x58] sm:$0xff]
        %v998 = vld [vmem:[%s438 + $0x60] sm:$0xff]
        %v999 = vld [vmem:[%s438 + $0x68] sm:$0xff]
        %v1000 = vld [vmem:[%s438 + $0x70] sm:$0xff]
        %v1001 = vld [vmem:[%s438 + $0x78] sm:$0xff]
        %v1002 = vld [vmem:[%s438 + $0x80] sm:$0xff]
        %v1003 = vld [vmem:[%s438 + $0x88] sm:$0xff]
        %v1004 = vld [vmem:[%s438 + $0x90] sm:$0xff]
        %v1005 = vld [vmem:[%s438 + $0x98] sm:$0xff]
        %v1006 = vld [vmem:[%s438 + $0xa0] sm:$0xff]
        %v1007 = vld [vmem:[%s438 + $0xa8] sm:$0xff]
        %v1008 = vld [vmem:[%s438 + $0xb0] sm:$0xff]
        %v1009 = vld [vmem:[%s438 + $0xb8] sm:$0xff]
        %v1010 = vld [vmem:[%s438 + $0xc0] sm:$0xff]
        %v1011 = vld [vmem:[%s438 + $0xc8] sm:$0xff]
        %v1012 = vld [vmem:[%s438 + $0xd0] sm:$0xff]
        %v1013 = vld [vmem:[%s438 + $0xd8] sm:$0xff]
        %v1014 = vld [vmem:[%s438 + $0xe0] sm:$0xff]
        %v1015 = vld [vmem:[%s438 + $0xe8] sm:$0xff]
        %v1016 = vld [vmem:[%s438 + $0xf0] sm:$0xff]
        %v1017 = vld [vmem:[%s438 + $0xf8] sm:$0xff]
        %v1018 = vld [vmem:[%s438 + $0x100] sm:$0xff]
        %v1019 = vld [vmem:[%s438 + $0x108] sm:$0xff]
        %v1020 = vld [vmem:[%s438 + $0x110] sm:$0xff]
        %v1021 = vld [vmem:[%s438 + $0x118] sm:$0xff]
        %v1022 = vld [vmem:[%s438 + $0x120] sm:$0xff]
        %v1023 = vld [vmem:[%s438 + $0x128] sm:$0xff]
        %v1024 = vld [vmem:[%s438 + $0x130] sm:$0xff]
        %v1025 = vld [vmem:[%s438 + $0x138] sm:$0xff]
        %v1026 = vld [vmem:[%s438 + $0x140] sm:$0xff]
        %v1027 = vld [vmem:[%s438 + $0x148] sm:$0xff]
        %v1028 = vld [vmem:[%s438 + $0x150] sm:$0xff]
        %v1029 = vld [vmem:[%s438 + $0x158] sm:$0xff]
        %v1030 = vld [vmem:[%s438 + $0x160] sm:$0xff]
        %v1031 = vld [vmem:[%s438 + $0x168] sm:$0xff]
        %v1032 = vld [vmem:[%s438 + $0x170] sm:$0xff]
        %v1033 = vld [vmem:[%s438 + $0x178] sm:$0xff]
        %v1034 = vld [vmem:[%s438 + $0x180] sm:$0xff]
        %v1035 = vld [vmem:[%s438 + $0x188] sm:$0xff]
        %v1036 = vld [vmem:[%s438 + $0x190] sm:$0xff]
        %v1037 = vld [vmem:[%s438 + $0x198] sm:$0xff]
        %v1038 = vld [vmem:[%s438 + $0x1a0] sm:$0xff]
        %v1039 = vld [vmem:[%s438 + $0x1a8] sm:$0xff]
        %v1040 = vld [vmem:[%s438 + $0x1b0] sm:$0xff]
        %v1041 = vld [vmem:[%s438 + $0x1b8] sm:$0xff]
        %v1042 = vld [vmem:[%s438 + $0x1c0] sm:$0xff]
        %v1043 = vld [vmem:[%s438 + $0x1c8] sm:$0xff]
        %v1044 = vld [vmem:[%s438 + $0x1d0] sm:$0xff]
        %v1045 = vld [vmem:[%s438 + $0x1d8] sm:$0xff]
        %v1046 = vld [vmem:[%s438 + $0x1e0] sm:$0xff]
        %v1047 = vld [vmem:[%s438 + $0x1e8] sm:$0xff]
        %v1048 = vld [vmem:[%s438 + $0x1f0] sm:$0xff]
        %v1049 = vld [vmem:[%s438 + $0x1f8] sm:$0xff]
        %v1050 = vld [vmem:[%s444] sm:$0xff]
        %v1051 = vld [vmem:[%s444 + $0x8] sm:$0xff]
        %v1052 = vld [vmem:[%s444 + $0x10] sm:$0xff]
        %v1053 = vld [vmem:[%s444 + $0x18] sm:$0xff]
        %v1054 = vld [vmem:[%s444 + $0x20] sm:$0xff]
        %v1055 = vld [vmem:[%s444 + $0x28] sm:$0xff]
        %v1056 = vld [vmem:[%s444 + $0x30] sm:$0xff]
        %v1057 = vld [vmem:[%s444 + $0x38] sm:$0xff]
        %v1058 = vld [vmem:[%s444 + $0x40] sm:$0xff]
        %v1059 = vld [vmem:[%s444 + $0x48] sm:$0xff]
        %v1060 = vld [vmem:[%s444 + $0x50] sm:$0xff]
        %v1061 = vld [vmem:[%s444 + $0x58] sm:$0xff]
        %v1062 = vld [vmem:[%s444 + $0x60] sm:$0xff]
        %v1063 = vld [vmem:[%s444 + $0x68] sm:$0xff]
        %v1064 = vld [vmem:[%s444 + $0x70] sm:$0xff]
        %v1065 = vld [vmem:[%s444 + $0x78] sm:$0xff]
        %v1066 = vld [vmem:[%s444 + $0x80] sm:$0xff]
        %v1067 = vld [vmem:[%s444 + $0x88] sm:$0xff]
        %v1068 = vld [vmem:[%s444 + $0x90] sm:$0xff]
        %v1069 = vld [vmem:[%s444 + $0x98] sm:$0xff]
        %v1070 = vld [vmem:[%s444 + $0xa0] sm:$0xff]
        %v1071 = vld [vmem:[%s444 + $0xa8] sm:$0xff]
        %v1072 = vld [vmem:[%s444 + $0xb0] sm:$0xff]
        %v1073 = vld [vmem:[%s444 + $0xb8] sm:$0xff]
        %v1074 = vld [vmem:[%s444 + $0xc0] sm:$0xff]
        %v1075 = vld [vmem:[%s444 + $0xc8] sm:$0xff]
        %v1076 = vld [vmem:[%s444 + $0xd0] sm:$0xff]
        %v1077 = vld [vmem:[%s444 + $0xd8] sm:$0xff]
        %v1078 = vld [vmem:[%s444 + $0xe0] sm:$0xff]
        %v1079 = vld [vmem:[%s444 + $0xe8] sm:$0xff]
        %v1080 = vld [vmem:[%s444 + $0xf0] sm:$0xff]
        %v1081 = vld [vmem:[%s444 + $0xf8] sm:$0xff]
        %v1082 = vld [vmem:[%s444 + $0x100] sm:$0xff]
        %v1083 = vld [vmem:[%s444 + $0x108] sm:$0xff]
        %v1084 = vld [vmem:[%s444 + $0x110] sm:$0xff]
        %v1085 = vld [vmem:[%s444 + $0x118] sm:$0xff]
        %v1086 = vld [vmem:[%s444 + $0x120] sm:$0xff]
        %v1087 = vld [vmem:[%s444 + $0x128] sm:$0xff]
        %v1088 = vld [vmem:[%s444 + $0x130] sm:$0xff]
        %v1089 = vld [vmem:[%s444 + $0x138] sm:$0xff]
        %v1090 = vld [vmem:[%s444 + $0x140] sm:$0xff]
        %v1091 = vld [vmem:[%s444 + $0x148] sm:$0xff]
        %v1092 = vld [vmem:[%s444 + $0x150] sm:$0xff]
        %v1093 = vld [vmem:[%s444 + $0x158] sm:$0xff]
        %v1094 = vld [vmem:[%s444 + $0x160] sm:$0xff]
        %v1095 = vld [vmem:[%s444 + $0x168] sm:$0xff]
        %v1096 = vld [vmem:[%s444 + $0x170] sm:$0xff]
        %v1097 = vld [vmem:[%s444 + $0x178] sm:$0xff]
        %v1098 = vld [vmem:[%s444 + $0x180] sm:$0xff]
        %v1099 = vld [vmem:[%s444 + $0x188] sm:$0xff]
        %v1100 = vld [vmem:[%s444 + $0x190] sm:$0xff]
        %v1101 = vld [vmem:[%s444 + $0x198] sm:$0xff]
        %v1102 = vld [vmem:[%s444 + $0x1a0] sm:$0xff]
        %v1103 = vld [vmem:[%s444 + $0x1a8] sm:$0xff]
        %v1104 = vld [vmem:[%s444 + $0x1b0] sm:$0xff]
        %v1105 = vld [vmem:[%s444 + $0x1b8] sm:$0xff]
        %v1106 = vld [vmem:[%s444 + $0x1c0] sm:$0xff]
        %v1107 = vld [vmem:[%s444 + $0x1c8] sm:$0xff]
        %v1108 = vld [vmem:[%s444 + $0x1d0] sm:$0xff]
        %v1109 = vld [vmem:[%s444 + $0x1d8] sm:$0xff]
        %v1110 = vld [vmem:[%s444 + $0x1e0] sm:$0xff]
        %v1111 = vld [vmem:[%s444 + $0x1e8] sm:$0xff]
        %v1112 = vld [vmem:[%s444 + $0x1f0] sm:$0xff]
        %v1113 = vld [vmem:[%s444 + $0x1f8] sm:$0xff]
        %1115 = vset.pattern.permute.xlu0 0
        %1116 = vperm.xlu0 %1115, %v1050
        %v1117 = vpop.permute.xlu0 %1116
        %1120 = vset.pattern.permute.xlu0 0
        %1121 = vperm.xlu0 %1120, %v1051
        %v1122 = vpop.permute.xlu0 %1121
        %1125 = vset.pattern.permute.xlu0 0
        %1126 = vperm.xlu0 %1125, %v1052
        %v1127 = vpop.permute.xlu0 %1126
        %1130 = vset.pattern.permute.xlu0 0
        %1131 = vperm.xlu0 %1130, %v1053
        %v1132 = vpop.permute.xlu0 %1131
        %1135 = vset.pattern.permute.xlu0 0
        %1136 = vperm.xlu0 %1135, %v1054
        %v1137 = vpop.permute.xlu0 %1136
        %1140 = vset.pattern.permute.xlu0 0
        %1141 = vperm.xlu0 %1140, %v1055
        %v1142 = vpop.permute.xlu0 %1141
        %1145 = vset.pattern.permute.xlu0 0
        %1146 = vperm.xlu0 %1145, %v1056
        %v1147 = vpop.permute.xlu0 %1146
        %1150 = vset.pattern.permute.xlu0 0
        %1151 = vperm.xlu0 %1150, %v1057
        %v1152 = vpop.permute.xlu0 %1151
        %1155 = vset.pattern.permute.xlu0 0
        %1156 = vperm.xlu0 %1155, %v1058
        %v1157 = vpop.permute.xlu0 %1156
        %1160 = vset.pattern.permute.xlu0 0
        %1161 = vperm.xlu0 %1160, %v1059
        %v1162 = vpop.permute.xlu0 %1161
        %1165 = vset.pattern.permute.xlu0 0
        %1166 = vperm.xlu0 %1165, %v1060
        %v1167 = vpop.permute.xlu0 %1166
        %1170 = vset.pattern.permute.xlu0 0
        %1171 = vperm.xlu0 %1170, %v1061
        %v1172 = vpop.permute.xlu0 %1171
        %1175 = vset.pattern.permute.xlu0 0
        %1176 = vperm.xlu0 %1175, %v1062
        %v1177 = vpop.permute.xlu0 %1176
        %1180 = vset.pattern.permute.xlu0 0
        %1181 = vperm.xlu0 %1180, %v1063
        %v1182 = vpop.permute.xlu0 %1181
        %1185 = vset.pattern.permute.xlu0 0
        %1186 = vperm.xlu0 %1185, %v1064
        %v1187 = vpop.permute.xlu0 %1186
        %1190 = vset.pattern.permute.xlu0 0
        %1191 = vperm.xlu0 %1190, %v1065
        %v1192 = vpop.permute.xlu0 %1191
        %1195 = vset.pattern.permute.xlu0 0
        %1196 = vperm.xlu0 %1195, %v1066
        %v1197 = vpop.permute.xlu0 %1196
        %1200 = vset.pattern.permute.xlu0 0
        %1201 = vperm.xlu0 %1200, %v1067
        %v1202 = vpop.permute.xlu0 %1201
        %1205 = vset.pattern.permute.xlu0 0
        %1206 = vperm.xlu0 %1205, %v1068
        %v1207 = vpop.permute.xlu0 %1206
        %1210 = vset.pattern.permute.xlu0 0
        %1211 = vperm.xlu0 %1210, %v1069
        %v1212 = vpop.permute.xlu0 %1211
        %1215 = vset.pattern.permute.xlu0 0
        %1216 = vperm.xlu0 %1215, %v1070
        %v1217 = vpop.permute.xlu0 %1216
        %1220 = vset.pattern.permute.xlu0 0
        %1221 = vperm.xlu0 %1220, %v1071
        %v1222 = vpop.permute.xlu0 %1221
        %1225 = vset.pattern.permute.xlu0 0
        %1226 = vperm.xlu0 %1225, %v1072
        %v1227 = vpop.permute.xlu0 %1226
        %1230 = vset.pattern.permute.xlu0 0
        %1231 = vperm.xlu0 %1230, %v1073
        %v1232 = vpop.permute.xlu0 %1231
        %1235 = vset.pattern.permute.xlu0 0
        %1236 = vperm.xlu0 %1235, %v1074
        %v1237 = vpop.permute.xlu0 %1236
        %1240 = vset.pattern.permute.xlu0 0
        %1241 = vperm.xlu0 %1240, %v1075
        %v1242 = vpop.permute.xlu0 %1241
        %1245 = vset.pattern.permute.xlu0 0
        %1246 = vperm.xlu0 %1245, %v1076
        %v1247 = vpop.permute.xlu0 %1246
        %1250 = vset.pattern.permute.xlu0 0
        %1251 = vperm.xlu0 %1250, %v1077
        %v1252 = vpop.permute.xlu0 %1251
        %1255 = vset.pattern.permute.xlu0 0
        %1256 = vperm.xlu0 %1255, %v1078
        %v1257 = vpop.permute.xlu0 %1256
        %1260 = vset.pattern.permute.xlu0 0
        %1261 = vperm.xlu0 %1260, %v1079
        %v1262 = vpop.permute.xlu0 %1261
        %1265 = vset.pattern.permute.xlu0 0
        %1266 = vperm.xlu0 %1265, %v1080
        %v1267 = vpop.permute.xlu0 %1266
        %1270 = vset.pattern.permute.xlu0 0
        %1271 = vperm.xlu0 %1270, %v1081
        %v1272 = vpop.permute.xlu0 %1271
        %1275 = vset.pattern.permute.xlu0 0
        %1276 = vperm.xlu0 %1275, %v1082
        %v1277 = vpop.permute.xlu0 %1276
        %1280 = vset.pattern.permute.xlu0 0
        %1281 = vperm.xlu0 %1280, %v1083
        %v1282 = vpop.permute.xlu0 %1281
        %1285 = vset.pattern.permute.xlu0 0
        %1286 = vperm.xlu0 %1285, %v1084
        %v1287 = vpop.permute.xlu0 %1286
        %1290 = vset.pattern.permute.xlu0 0
        %1291 = vperm.xlu0 %1290, %v1085
        %v1292 = vpop.permute.xlu0 %1291
        %1295 = vset.pattern.permute.xlu0 0
        %1296 = vperm.xlu0 %1295, %v1086
        %v1297 = vpop.permute.xlu0 %1296
        %1300 = vset.pattern.permute.xlu0 0
        %1301 = vperm.xlu0 %1300, %v1087
        %v1302 = vpop.permute.xlu0 %1301
        %1305 = vset.pattern.permute.xlu0 0
        %1306 = vperm.xlu0 %1305, %v1088
        %v1307 = vpop.permute.xlu0 %1306
        %1310 = vset.pattern.permute.xlu0 0
        %1311 = vperm.xlu0 %1310, %v1089
        %v1312 = vpop.permute.xlu0 %1311
        %1315 = vset.pattern.permute.xlu0 0
        %1316 = vperm.xlu0 %1315, %v1090
        %v1317 = vpop.permute.xlu0 %1316
        %1320 = vset.pattern.permute.xlu0 0
        %1321 = vperm.xlu0 %1320, %v1091
        %v1322 = vpop.permute.xlu0 %1321
        %1325 = vset.pattern.permute.xlu0 0
        %1326 = vperm.xlu0 %1325, %v1092
        %v1327 = vpop.permute.xlu0 %1326
        %1330 = vset.pattern.permute.xlu0 0
        %1331 = vperm.xlu0 %1330, %v1093
        %v1332 = vpop.permute.xlu0 %1331
        %1335 = vset.pattern.permute.xlu0 0
        %1336 = vperm.xlu0 %1335, %v1094
        %v1337 = vpop.permute.xlu0 %1336
        %1340 = vset.pattern.permute.xlu0 0
        %1341 = vperm.xlu0 %1340, %v1095
        %v1342 = vpop.permute.xlu0 %1341
        %1345 = vset.pattern.permute.xlu0 0
        %1346 = vperm.xlu0 %1345, %v1096
        %v1347 = vpop.permute.xlu0 %1346
        %1350 = vset.pattern.permute.xlu0 0
        %1351 = vperm.xlu0 %1350, %v1097
        %v1352 = vpop.permute.xlu0 %1351
        %1355 = vset.pattern.permute.xlu0 0
        %1356 = vperm.xlu0 %1355, %v1098
        %v1357 = vpop.permute.xlu0 %1356
        %1360 = vset.pattern.permute.xlu0 0
        %1361 = vperm.xlu0 %1360, %v1099
        %v1362 = vpop.permute.xlu0 %1361
        %1365 = vset.pattern.permute.xlu0 0
        %1366 = vperm.xlu0 %1365, %v1100
        %v1367 = vpop.permute.xlu0 %1366
        %1370 = vset.pattern.permute.xlu0 0
        %1371 = vperm.xlu0 %1370, %v1101
        %v1372 = vpop.permute.xlu0 %1371
        %1375 = vset.pattern.permute.xlu0 0
        %1376 = vperm.xlu0 %1375, %v1102
        %v1377 = vpop.permute.xlu0 %1376
        %1380 = vset.pattern.permute.xlu0 0
        %1381 = vperm.xlu0 %1380, %v1103
        %v1382 = vpop.permute.xlu0 %1381
        %1385 = vset.pattern.permute.xlu0 0
        %1386 = vperm.xlu0 %1385, %v1104
        %v1387 = vpop.permute.xlu0 %1386
        %1390 = vset.pattern.permute.xlu0 0
        %1391 = vperm.xlu0 %1390, %v1105
        %v1392 = vpop.permute.xlu0 %1391
        %1395 = vset.pattern.permute.xlu0 0
        %1396 = vperm.xlu0 %1395, %v1106
        %v1397 = vpop.permute.xlu0 %1396
        %1400 = vset.pattern.permute.xlu0 0
        %1401 = vperm.xlu0 %1400, %v1107
        %v1402 = vpop.permute.xlu0 %1401
        %1405 = vset.pattern.permute.xlu0 0
        %1406 = vperm.xlu0 %1405, %v1108
        %v1407 = vpop.permute.xlu0 %1406
        %1410 = vset.pattern.permute.xlu0 0
        %1411 = vperm.xlu0 %1410, %v1109
        %v1412 = vpop.permute.xlu0 %1411
        %1415 = vset.pattern.permute.xlu0 0
        %1416 = vperm.xlu0 %1415, %v1110
        %v1417 = vpop.permute.xlu0 %1416
        %1420 = vset.pattern.permute.xlu0 0
        %1421 = vperm.xlu0 %1420, %v1111
        %v1422 = vpop.permute.xlu0 %1421
        %1425 = vset.pattern.permute.xlu0 0
        %1426 = vperm.xlu0 %1425, %v1112
        %v1427 = vpop.permute.xlu0 %1426
        %1430 = vset.pattern.permute.xlu0 0
        %1431 = vperm.xlu0 %1430, %v1113
        %v1432 = vpop.permute.xlu0 %1431
        %v1435 = vsel %vm501, %v986, 0
        %v1438 = vsel %vm501, %v987, 0
        %v1441 = vsel %vm501, %v988, 0
        %v1444 = vsel %vm501, %v989, 0
        %v1447 = vsel %vm501, %v990, 0
        %v1450 = vsel %vm501, %v991, 0
        %v1453 = vsel %vm501, %v992, 0
        %v1456 = vsel %vm501, %v993, 0
        %v1459 = vsel %vm501, %v994, 0
        %v1462 = vsel %vm501, %v995, 0
        %v1465 = vsel %vm501, %v996, 0
        %v1468 = vsel %vm501, %v997, 0
        %v1471 = vsel %vm501, %v998, 0
        %v1474 = vsel %vm501, %v999, 0
        %v1477 = vsel %vm501, %v1000, 0
        %v1480 = vsel %vm501, %v1001, 0
        %v1483 = vsel %vm501, %v1002, 0
        %v1486 = vsel %vm501, %v1003, 0
        %v1489 = vsel %vm501, %v1004, 0
        %v1492 = vsel %vm501, %v1005, 0
        %v1495 = vsel %vm501, %v1006, 0
        %v1498 = vsel %vm501, %v1007, 0
        %v1501 = vsel %vm501, %v1008, 0
        %v1504 = vsel %vm501, %v1009, 0
        %v1507 = vsel %vm501, %v1010, 0
        %v1510 = vsel %vm501, %v1011, 0
        %v1513 = vsel %vm501, %v1012, 0
        %v1516 = vsel %vm501, %v1013, 0
        %v1519 = vsel %vm501, %v1014, 0
        %v1522 = vsel %vm501, %v1015, 0
        %v1525 = vsel %vm501, %v1016, 0
        %v1528 = vsel %vm501, %v1017, 0
        %v1531 = vsel %vm501, %v1018, 0
        %v1534 = vsel %vm501, %v1019, 0
        %v1537 = vsel %vm501, %v1020, 0
        %v1540 = vsel %vm501, %v1021, 0
        %v1543 = vsel %vm501, %v1022, 0
        %v1546 = vsel %vm501, %v1023, 0
        %v1549 = vsel %vm501, %v1024, 0
        %v1552 = vsel %vm501, %v1025, 0
        %v1555 = vsel %vm501, %v1026, 0
        %v1558 = vsel %vm501, %v1027, 0
        %v1561 = vsel %vm501, %v1028, 0
        %v1564 = vsel %vm501, %v1029, 0
        %v1567 = vsel %vm501, %v1030, 0
        %v1570 = vsel %vm501, %v1031, 0
        %v1573 = vsel %vm501, %v1032, 0
        %v1576 = vsel %vm501, %v1033, 0
        %v1579 = vsel %vm501, %v1034, 0
        %v1582 = vsel %vm501, %v1035, 0
        %v1585 = vsel %vm501, %v1036, 0
        %v1588 = vsel %vm501, %v1037, 0
        %v1591 = vsel %vm501, %v1038, 0
        %v1594 = vsel %vm501, %v1039, 0
        %v1597 = vsel %vm501, %v1040, 0
        %v1600 = vsel %vm501, %v1041, 0
        %v1603 = vsel %vm501, %v1042, 0
        %v1606 = vsel %vm501, %v1043, 0
        %v1609 = vsel %vm501, %v1044, 0
        %v1612 = vsel %vm501, %v1045, 0
        %v1615 = vsel %vm501, %v1046, 0
        %v1618 = vsel %vm501, %v1047, 0
        %v1621 = vsel %vm501, %v1048, 0
        %v1624 = vsel %vm501, %v1049, 0
        %1626 = vmatprep.subr.mxu0 %v971
        %1627 = vmatpush1.msra.mxu0 %v970
        %1628 = vmatprep.subr.mxu0 %v975
        %1629 = vmatpush1.msra.mxu0 %v974
        %1630 = vmatprep.subr.mxu0 %v979
        %1631 = vmatpush1.msra.mxu0 %v978
        %1632 = vmatprep.subr.mxu0 %v983
        %1633 = vmatpush1.msra.mxu0 %v982
        %1634 = vmatprep.subr.mxu0 0.0
        %1635 = vmatpush1.msra.mxu0 0.0
        %1636 = vmatprep.subr.mxu0 0.0
        %1637 = vmatpush1.msra.mxu0 0.0
        %1638 = vmatprep.subr.mxu0 0.0
        %1639 = vmatpush1.msra.mxu0 0.0
        %1640 = vmatprep.subr.mxu0 0.0
        %1641 = vmatpush1.msra.mxu0 0.0
        %1642 = vmatprep.subr.mxu0 0.0
        %1643 = vmatpush1.msra.mxu0 0.0
        %1644 = vmatprep.subr.mxu0 0.0
        %1645 = vmatpush1.msra.mxu0 0.0
        %1646 = vmatprep.subr.mxu0 0.0
        %1647 = vmatpush1.msra.mxu0 0.0
        %1648 = vmatprep.subr.mxu0 0.0
        %1649 = vmatpush1.msra.mxu0 0.0
        %1650 = vmatprep.subr.mxu0 0.0
        %1651 = vmatpush1.msra.mxu0 0.0
        %1652 = vmatprep.subr.mxu0 0.0
        %1653 = vmatpush1.msra.mxu0 0.0
        %1654 = vmatprep.subr.mxu0 0.0
        %1655 = vmatpush1.msra.mxu0 0.0
        %1656 = vmatprep.subr.mxu0 0.0
        %1657 = vmatpush1.msra.mxu0 0.0
        %1658 = vmatprep.subr.mxu0 0.0
        %1659 = vmatpush1.msra.mxu0 0.0
        %1660 = vmatprep.subr.mxu0 0.0
        %1661 = vmatpush1.msra.mxu0 0.0
        %1662 = vmatprep.subr.mxu0 0.0
        %1663 = vmatpush1.msra.mxu0 0.0
        %1664 = vmatprep.subr.mxu0 0.0
        %1665 = vmatpush1.msra.mxu0 0.0
        %1666 = vmatprep.subr.mxu0 0.0
        %1667 = vmatpush1.msra.mxu0 0.0
        %1668 = vmatprep.subr.mxu0 0.0
        %1669 = vmatpush1.msra.mxu0 0.0
        %1670 = vmatprep.subr.mxu0 0.0
        %1671 = vmatpush1.msra.mxu0 0.0
        %1672 = vmatprep.subr.mxu0 0.0
        %1673 = vmatpush1.msra.mxu0 0.0
        %1674 = vmatprep.subr.mxu0 0.0
        %1675 = vmatpush1.msra.mxu0 0.0
        %1676 = vmatprep.subr.mxu0 0.0
        %1677 = vmatpush1.msra.mxu0 0.0
        %1678 = vmatprep.subr.mxu0 0.0
        %1679 = vmatpush1.msra.mxu0 0.0
        %1680 = vmatprep.subr.mxu0 0.0
        %1681 = vmatpush1.msra.mxu0 0.0
        %1682 = vmatprep.subr.mxu0 0.0
        %1683 = vmatpush1.msra.mxu0 0.0
        %1684 = vmatprep.subr.mxu0 0.0
        %1685 = vmatpush1.msra.mxu0 0.0
        %1686 = vmatprep.subr.mxu0 0.0
        %1687 = vmatpush1.msra.mxu0 0.0
        %1688 = vmatprep.subr.mxu0 0.0
        %1689 = vmatpush1.msra.mxu0 0.0
        %1690 = vmatprep.mubr.f32.mxu0 0.0
        %1691 = vmatmul.mubr.f32.gmra.mrb[0].mxu0 %v1435
        %v1692 = vpop.f32.mrb[0].mxu0
        %v1693 = vadd.f32 %v1117, %v1692
        %v1694 = vpop.f32.mrb[0].mxu0
        %v1695 = vadd.f32 %v1117, %v1694
        %1696 = vmatprep.mubr.f32.mxu0 0.0
        %1697 = vmatmul.mubr.f32.gmra.mrb[0].mxu0 %v1438
        %v1698 = vpop.f32.mrb[0].mxu0
        %v1699 = vadd.f32 %v1122, %v1698
        %v1700 = vpop.f32.mrb[0].mxu0
        %v1701 = vadd.f32 %v1122, %v1700
        %1702 = vmatprep.mubr.f32.mxu0 0.0
        %1703 = vmatmul.mubr.f32.gmra.mrb[0].mxu0 %v1441
        %v1704 = vpop.f32.mrb[0].mxu0
        %v1705 = vadd.f32 %v1127, %v1704
        %v1706 = vpop.f32.mrb[0].mxu0
        %v1707 = vadd.f32 %v1127, %v1706
        %1708 = vmatprep.mubr.f32.mxu0 0.0
        %1709 = vmatmul.mubr.f32.gmra.mrb[0].mxu0 %v1444
        %v1710 = vpop.f32.mrb[0].mxu0
        %v1711 = vadd.f32 %v1132, %v1710
        %v1712 = vpop.f32.mrb[0].mxu0
        %v1713 = vadd.f32 %v1132, %v1712
        %1714 = vmatprep.mubr.f32.mxu0 0.0
        %1715 = vmatmul.mubr.f32.gmra.mrb[0].mxu0 %v1447
        %v1716 = vpop.f32.mrb[0].mxu0
        %v1717 = vadd.f32 %v1137, %v1716
        %v1718 = vpop.f32.mrb[0].mxu0
        %v1719 = vadd.f32 %v1137, %v1718
        %1720 = vmatprep.mubr.f32.mxu0 0.0
        %1721 = vmatmul.mubr.f32.gmra.mrb[0].mxu0 %v1450
        %v1722 = vpop.f32.mrb[0].mxu0
        %v1723 = vadd.f32 %v1142, %v1722
        %v1724 = vpop.f32.mrb[0].mxu0
        %v1725 = vadd.f32 %v1142, %v1724
        %1726 = vmatprep.mubr.f32.mxu0 0.0
        %1727 = vmatmul.mubr.f32.gmra.mrb[0].mxu0 %v1453
        %v1728 = vpop.f32.mrb[0].mxu0
        %v1729 = vadd.f32 %v1147, %v1728
        %v1730 = vpop.f32.mrb[0].mxu0
        %v1731 = vadd.f32 %v1147, %v1730
        %1732 = vmatprep.mubr.f32.mxu0 0.0
        %1733 = vmatmul.mubr.f32.gmra.mrb[0].mxu0 %v1456
        %v1734 = vpop.f32.mrb[0].mxu0
        %v1735 = vadd.f32 %v1152, %v1734
        %v1736 = vpop.f32.mrb[0].mxu0
        %v1737 = vadd.f32 %v1152, %v1736
        %1738 = vmatprep.mubr.f32.mxu0 0.0
        %1739 = vmatmul.mubr.f32.gmra.mrb[0].mxu0 %v1459
        %v1740 = vpop.f32.mrb[0].mxu0
        %v1741 = vadd.f32 %v1157, %v1740
        %v1742 = vpop.f32.mrb[0].mxu0
        %v1743 = vadd.f32 %v1157, %v1742
        %1744 = vmatprep.mubr.f32.mxu0 0.0
        %1745 = vmatmul.mubr.f32.gmra.mrb[0].mxu0 %v1462
        %v1746 = vpop.f32.mrb[0].mxu0
        %v1747 = vadd.f32 %v1162, %v1746
        %v1748 = vpop.f32.mrb[0].mxu0
        %v1749 = vadd.f32 %v1162, %v1748
        %1750 = vmatprep.mubr.f32.mxu0 0.0
        %1751 = vmatmul.mubr.f32.gmra.mrb[0].mxu0 %v1465
        %v1752 = vpop.f32.mrb[0].mxu0
        %v1753 = vadd.f32 %v1167, %v1752
        %v1754 = vpop.f32.mrb[0].mxu0
        %v1755 = vadd.f32 %v1167, %v1754
        %1756 = vmatprep.mubr.f32.mxu0 0.0
        %1757 = vmatmul.mubr.f32.gmra.mrb[0].mxu0 %v1468
        %v1758 = vpop.f32.mrb[0].mxu0
        %v1759 = vadd.f32 %v1172, %v1758
        %v1760 = vpop.f32.mrb[0].mxu0
        %v1761 = vadd.f32 %v1172, %v1760
        %1762 = vmatprep.mubr.f32.mxu0 0.0
        %1763 = vmatmul.mubr.f32.gmra.mrb[0].mxu0 %v1471
        %v1764 = vpop.f32.mrb[0].mxu0
        %v1765 = vadd.f32 %v1177, %v1764
        %v1766 = vpop.f32.mrb[0].mxu0
        %v1767 = vadd.f32 %v1177, %v1766
        %1768 = vmatprep.mubr.f32.mxu0 0.0
        %1769 = vmatmul.mubr.f32.gmra.mrb[0].mxu0 %v1474
        %v1770 = vpop.f32.mrb[0].mxu0
        %v1771 = vadd.f32 %v1182, %v1770
        %v1772 = vpop.f32.mrb[0].mxu0
        %v1773 = vadd.f32 %v1182, %v1772
        %1774 = vmatprep.mubr.f32.mxu0 0.0
        %1775 = vmatmul.mubr.f32.gmra.mrb[0].mxu0 %v1477
        %v1776 = vpop.f32.mrb[0].mxu0
        %v1777 = vadd.f32 %v1187, %v1776
        %v1778 = vpop.f32.mrb[0].mxu0
        %v1779 = vadd.f32 %v1187, %v1778
        %1780 = vmatprep.mubr.f32.mxu0 0.0
        %1781 = vmatmul.mubr.f32.gmra.mrb[0].mxu0 %v1480
        %v1782 = vpop.f32.mrb[0].mxu0
        %v1783 = vadd.f32 %v1192, %v1782
        %v1784 = vpop.f32.mrb[0].mxu0
        %v1785 = vadd.f32 %v1192, %v1784
        %1786 = vmatprep.mubr.f32.mxu0 0.0
        %1787 = vmatmul.mubr.f32.gmra.mrb[0].mxu0 %v1483
        %v1788 = vpop.f32.mrb[0].mxu0
        %v1789 = vadd.f32 %v1197, %v1788
        %v1790 = vpop.f32.mrb[0].mxu0
        %v1791 = vadd.f32 %v1197, %v1790
        %1792 = vmatprep.mubr.f32.mxu0 0.0
        %1793 = vmatmul.mubr.f32.gmra.mrb[0].mxu0 %v1486
        %v1794 = vpop.f32.mrb[0].mxu0
        %v1795 = vadd.f32 %v1202, %v1794
        %v1796 = vpop.f32.mrb[0].mxu0
        %v1797 = vadd.f32 %v1202, %v1796
        %1798 = vmatprep.mubr.f32.mxu0 0.0
        %1799 = vmatmul.mubr.f32.gmra.mrb[0].mxu0 %v1489
        %v1800 = vpop.f32.mrb[0].mxu0
        %v1801 = vadd.f32 %v1207, %v1800
        %v1802 = vpop.f32.mrb[0].mxu0
        %v1803 = vadd.f32 %v1207, %v1802
        %1804 = vmatprep.mubr.f32.mxu0 0.0
        %1805 = vmatmul.mubr.f32.gmra.mrb[0].mxu0 %v1492
        %v1806 = vpop.f32.mrb[0].mxu0
        %v1807 = vadd.f32 %v1212, %v1806
        %v1808 = vpop.f32.mrb[0].mxu0
        %v1809 = vadd.f32 %v1212, %v1808
        %1810 = vmatprep.mubr.f32.mxu0 0.0
        %1811 = vmatmul.mubr.f32.gmra.mrb[0].mxu0 %v1495
        %v1812 = vpop.f32.mrb[0].mxu0
        %v1813 = vadd.f32 %v1217, %v1812
        %v1814 = vpop.f32.mrb[0].mxu0
        %v1815 = vadd.f32 %v1217, %v1814
        %1816 = vmatprep.mubr.f32.mxu0 0.0
        %1817 = vmatmul.mubr.f32.gmra.mrb[0].mxu0 %v1498
        %v1818 = vpop.f32.mrb[0].mxu0
        %v1819 = vadd.f32 %v1222, %v1818
        %v1820 = vpop.f32.mrb[0].mxu0
        %v1821 = vadd.f32 %v1222, %v1820
        %1822 = vmatprep.mubr.f32.mxu0 0.0
        %1823 = vmatmul.mubr.f32.gmra.mrb[0].mxu0 %v1501
        %v1824 = vpop.f32.mrb[0].mxu0
        %v1825 = vadd.f32 %v1227, %v1824
        %v1826 = vpop.f32.mrb[0].mxu0
        %v1827 = vadd.f32 %v1227, %v1826
        %1828 = vmatprep.mubr.f32.mxu0 0.0
        %1829 = vmatmul.mubr.f32.gmra.mrb[0].mxu0 %v1504
        %v1830 = vpop.f32.mrb[0].mxu0
        %v1831 = vadd.f32 %v1232, %v1830
        %v1832 = vpop.f32.mrb[0].mxu0
        %v1833 = vadd.f32 %v1232, %v1832
        %1834 = vmatprep.mubr.f32.mxu0 0.0
        %1835 = vmatmul.mubr.f32.gmra.mrb[0].mxu0 %v1507
        %v1836 = vpop.f32.mrb[0].mxu0
        %v1837 = vadd.f32 %v1237, %v1836
        %v1838 = vpop.f32.mrb[0].mxu0
        %v1839 = vadd.f32 %v1237, %v1838
        %1840 = vmatprep.mubr.f32.mxu0 0.0
        %1841 = vmatmul.mubr.f32.gmra.mrb[0].mxu0 %v1510
        %v1842 = vpop.f32.mrb[0].mxu0
        %v1843 = vadd.f32 %v1242, %v1842
        %v1844 = vpop.f32.mrb[0].mxu0
        %v1845 = vadd.f32 %v1242, %v1844
        %1846 = vmatprep.mubr.f32.mxu0 0.0
        %1847 = vmatmul.mubr.f32.gmra.mrb[0].mxu0 %v1513
        %v1848 = vpop.f32.mrb[0].mxu0
        %v1849 = vadd.f32 %v1247, %v1848
        %v1850 = vpop.f32.mrb[0].mxu0
        %v1851 = vadd.f32 %v1247, %v1850
        %1852 = vmatprep.mubr.f32.mxu0 0.0
        %1853 = vmatmul.mubr.f32.gmra.mrb[0].mxu0 %v1516
        %v1854 = vpop.f32.mrb[0].mxu0
        %v1855 = vadd.f32 %v1252, %v1854
        %v1856 = vpop.f32.mrb[0].mxu0
        %v1857 = vadd.f32 %v1252, %v1856
        %1858 = vmatprep.mubr.f32.mxu0 0.0
        %1859 = vmatmul.mubr.f32.gmra.mrb[0].mxu0 %v1519
        %v1860 = vpop.f32.mrb[0].mxu0
        %v1861 = vadd.f32 %v1257, %v1860
        %v1862 = vpop.f32.mrb[0].mxu0
        %v1863 = vadd.f32 %v1257, %v1862
        %1864 = vmatprep.mubr.f32.mxu0 0.0
        %1865 = vmatmul.mubr.f32.gmra.mrb[0].mxu0 %v1522
        %v1866 = vpop.f32.mrb[0].mxu0
        %v1867 = vadd.f32 %v1262, %v1866
        %v1868 = vpop.f32.mrb[0].mxu0
        %v1869 = vadd.f32 %v1262, %v1868
        %1870 = vmatprep.mubr.f32.mxu0 0.0
        %1871 = vmatmul.mubr.f32.gmra.mrb[0].mxu0 %v1525
        %v1872 = vpop.f32.mrb[0].mxu0
        %v1873 = vadd.f32 %v1267, %v1872
        %v1874 = vpop.f32.mrb[0].mxu0
        %v1875 = vadd.f32 %v1267, %v1874
        %1876 = vmatprep.mubr.f32.mxu0 0.0
        %1877 = vmatmul.mubr.f32.gmra.mrb[0].mxu0 %v1528
        %v1878 = vpop.f32.mrb[0].mxu0
        %v1879 = vadd.f32 %v1272, %v1878
        %v1880 = vpop.f32.mrb[0].mxu0
        %v1881 = vadd.f32 %v1272, %v1880
        %1882 = vmatprep.mubr.f32.mxu0 0.0
        %1883 = vmatmul.mubr.f32.gmra.mrb[0].mxu0 %v1531
        %v1884 = vpop.f32.mrb[0].mxu0
        %v1885 = vadd.f32 %v1277, %v1884
        %v1886 = vpop.f32.mrb[0].mxu0
        %v1887 = vadd.f32 %v1277, %v1886
        %1888 = vmatprep.mubr.f32.mxu0 0.0
        %1889 = vmatmul.mubr.f32.gmra.mrb[0].mxu0 %v1534
        %v1890 = vpop.f32.mrb[0].mxu0
        %v1891 = vadd.f32 %v1282, %v1890
        %v1892 = vpop.f32.mrb[0].mxu0
        %v1893 = vadd.f32 %v1282, %v1892
        %1894 = vmatprep.mubr.f32.mxu0 0.0
        %1895 = vmatmul.mubr.f32.gmra.mrb[0].mxu0 %v1537
        %v1896 = vpop.f32.mrb[0].mxu0
        %v1897 = vadd.f32 %v1287, %v1896
        %v1898 = vpop.f32.mrb[0].mxu0
        %v1899 = vadd.f32 %v1287, %v1898
        %1900 = vmatprep.mubr.f32.mxu0 0.0
        %1901 = vmatmul.mubr.f32.gmra.mrb[0].mxu0 %v1540
        %v1902 = vpop.f32.mrb[0].mxu0
        %v1903 = vadd.f32 %v1292, %v1902
        %v1904 = vpop.f32.mrb[0].mxu0
        %v1905 = vadd.f32 %v1292, %v1904
        %1906 = vmatprep.mubr.f32.mxu0 0.0
        %1907 = vmatmul.mubr.f32.gmra.mrb[0].mxu0 %v1543
        %v1908 = vpop.f32.mrb[0].mxu0
        %v1909 = vadd.f32 %v1297, %v1908
        %v1910 = vpop.f32.mrb[0].mxu0
        %v1911 = vadd.f32 %v1297, %v1910
        %1912 = vmatprep.mubr.f32.mxu0 0.0
        %1913 = vmatmul.mubr.f32.gmra.mrb[0].mxu0 %v1546
        %v1914 = vpop.f32.mrb[0].mxu0
        %v1915 = vadd.f32 %v1302, %v1914
        %v1916 = vpop.f32.mrb[0].mxu0
        %v1917 = vadd.f32 %v1302, %v1916
        %1918 = vmatprep.mubr.f32.mxu0 0.0
        %1919 = vmatmul.mubr.f32.gmra.mrb[0].mxu0 %v1549
        %v1920 = vpop.f32.mrb[0].mxu0
        %v1921 = vadd.f32 %v1307, %v1920
        %v1922 = vpop.f32.mrb[0].mxu0
        %v1923 = vadd.f32 %v1307, %v1922
        %1924 = vmatprep.mubr.f32.mxu0 0.0
        %1925 = vmatmul.mubr.f32.gmra.mrb[0].mxu0 %v1552
        %v1926 = vpop.f32.mrb[0].mxu0
        %v1927 = vadd.f32 %v1312, %v1926
        %v1928 = vpop.f32.mrb[0].mxu0
        %v1929 = vadd.f32 %v1312, %v1928
        %1930 = vmatprep.mubr.f32.mxu0 0.0
        %1931 = vmatmul.mubr.f32.gmra.mrb[0].mxu0 %v1555
        %v1932 = vpop.f32.mrb[0].mxu0
        %v1933 = vadd.f32 %v1317, %v1932
        %v1934 = vpop.f32.mrb[0].mxu0
        %v1935 = vadd.f32 %v1317, %v1934
        %1936 = vmatprep.mubr.f32.mxu0 0.0
        %1937 = vmatmul.mubr.f32.gmra.mrb[0].mxu0 %v1558
        %v1938 = vpop.f32.mrb[0].mxu0
        %v1939 = vadd.f32 %v1322, %v1938
        %v1940 = vpop.f32.mrb[0].mxu0
        %v1941 = vadd.f32 %v1322, %v1940
        %1942 = vmatprep.mubr.f32.mxu0 0.0
        %1943 = vmatmul.mubr.f32.gmra.mrb[0].mxu0 %v1561
        %v1944 = vpop.f32.mrb[0].mxu0
        %v1945 = vadd.f32 %v1327, %v1944
        %v1946 = vpop.f32.mrb[0].mxu0
        %v1947 = vadd.f32 %v1327, %v1946
        %1948 = vmatprep.mubr.f32.mxu0 0.0
        %1949 = vmatmul.mubr.f32.gmra.mrb[0].mxu0 %v1564
        %v1950 = vpop.f32.mrb[0].mxu0
        %v1951 = vadd.f32 %v1332, %v1950
        %v1952 = vpop.f32.mrb[0].mxu0
        %v1953 = vadd.f32 %v1332, %v1952
        %1954 = vmatprep.mubr.f32.mxu0 0.0
        %1955 = vmatmul.mubr.f32.gmra.mrb[0].mxu0 %v1567
        %v1956 = vpop.f32.mrb[0].mxu0
        %v1957 = vadd.f32 %v1337, %v1956
        %v1958 = vpop.f32.mrb[0].mxu0
        %v1959 = vadd.f32 %v1337, %v1958
        %1960 = vmatprep.mubr.f32.mxu0 0.0
        %1961 = vmatmul.mubr.f32.gmra.mrb[0].mxu0 %v1570
        %v1962 = vpop.f32.mrb[0].mxu0
        %v1963 = vadd.f32 %v1342, %v1962
        %v1964 = vpop.f32.mrb[0].mxu0
        %v1965 = vadd.f32 %v1342, %v1964
        %1966 = vmatprep.mubr.f32.mxu0 0.0
        %1967 = vmatmul.mubr.f32.gmra.mrb[0].mxu0 %v1573
        %v1968 = vpop.f32.mrb[0].mxu0
        %v1969 = vadd.f32 %v1347, %v1968
        %v1970 = vpop.f32.mrb[0].mxu0
        %v1971 = vadd.f32 %v1347, %v1970
        %1972 = vmatprep.mubr.f32.mxu0 0.0
        %1973 = vmatmul.mubr.f32.gmra.mrb[0].mxu0 %v1576
        %v1974 = vpop.f32.mrb[0].mxu0
        %v1975 = vadd.f32 %v1352, %v1974
        %v1976 = vpop.f32.mrb[0].mxu0
        %v1977 = vadd.f32 %v1352, %v1976
        %1978 = vmatprep.mubr.f32.mxu0 0.0
        %1979 = vmatmul.mubr.f32.gmra.mrb[0].mxu0 %v1579
        %v1980 = vpop.f32.mrb[0].mxu0
        %v1981 = vadd.f32 %v1357, %v1980
        %v1982 = vpop.f32.mrb[0].mxu0
        %v1983 = vadd.f32 %v1357, %v1982
        %1984 = vmatprep.mubr.f32.mxu0 0.0
        %1985 = vmatmul.mubr.f32.gmra.mrb[0].mxu0 %v1582
        %v1986 = vpop.f32.mrb[0].mxu0
        %v1987 = vadd.f32 %v1362, %v1986
        %v1988 = vpop.f32.mrb[0].mxu0
        %v1989 = vadd.f32 %v1362, %v1988
        %1990 = vmatprep.mubr.f32.mxu0 0.0
        %1991 = vmatmul.mubr.f32.gmra.mrb[0].mxu0 %v1585
        %v1992 = vpop.f32.mrb[0].mxu0
        %v1993 = vadd.f32 %v1367, %v1992
        %v1994 = vpop.f32.mrb[0].mxu0
        %v1995 = vadd.f32 %v1367, %v1994
        %1996 = vmatprep.mubr.f32.mxu0 0.0
        %1997 = vmatmul.mubr.f32.gmra.mrb[0].mxu0 %v1588
        %v1998 = vpop.f32.mrb[0].mxu0
        %v1999 = vadd.f32 %v1372, %v1998
        %v2000 = vpop.f32.mrb[0].mxu0
        %v2001 = vadd.f32 %v1372, %v2000
        %2002 = vmatprep.mubr.f32.mxu0 0.0
        %2003 = vmatmul.mubr.f32.gmra.mrb[0].mxu0 %v1591
        %v2004 = vpop.f32.mrb[0].mxu0
        %v2005 = vadd.f32 %v1377, %v2004
        %v2006 = vpop.f32.mrb[0].mxu0
        %v2007 = vadd.f32 %v1377, %v2006
        %2008 = vmatprep.mubr.f32.mxu0 0.0
        %2009 = vmatmul.mubr.f32.gmra.mrb[0].mxu0 %v1594
        %v2010 = vpop.f32.mrb[0].mxu0
        %v2011 = vadd.f32 %v1382, %v2010
        %v2012 = vpop.f32.mrb[0].mxu0
        %v2013 = vadd.f32 %v1382, %v2012
        %2014 = vmatprep.mubr.f32.mxu0 0.0
        %2015 = vmatmul.mubr.f32.gmra.mrb[0].mxu0 %v1597
        %v2016 = vpop.f32.mrb[0].mxu0
        %v2017 = vadd.f32 %v1387, %v2016
        %v2018 = vpop.f32.mrb[0].mxu0
        %v2019 = vadd.f32 %v1387, %v2018
        %2020 = vmatprep.mubr.f32.mxu0 0.0
        %2021 = vmatmul.mubr.f32.gmra.mrb[0].mxu0 %v1600
        %v2022 = vpop.f32.mrb[0].mxu0
        %v2023 = vadd.f32 %v1392, %v2022
        %v2024 = vpop.f32.mrb[0].mxu0
        %v2025 = vadd.f32 %v1392, %v2024
        %2026 = vmatprep.mubr.f32.mxu0 0.0
        %2027 = vmatmul.mubr.f32.gmra.mrb[0].mxu0 %v1603
        %v2028 = vpop.f32.mrb[0].mxu0
        %v2029 = vadd.f32 %v1397, %v2028
        %v2030 = vpop.f32.mrb[0].mxu0
        %v2031 = vadd.f32 %v1397, %v2030
        %2032 = vmatprep.mubr.f32.mxu0 0.0
        %2033 = vmatmul.mubr.f32.gmra.mrb[0].mxu0 %v1606
        %v2034 = vpop.f32.mrb[0].mxu0
        %v2035 = vadd.f32 %v1402, %v2034
        %v2036 = vpop.f32.mrb[0].mxu0
        %v2037 = vadd.f32 %v1402, %v2036
        %2038 = vmatprep.mubr.f32.mxu0 0.0
        %2039 = vmatmul.mubr.f32.gmra.mrb[0].mxu0 %v1609
        %v2040 = vpop.f32.mrb[0].mxu0
        %v2041 = vadd.f32 %v1407, %v2040
        %v2042 = vpop.f32.mrb[0].mxu0
        %v2043 = vadd.f32 %v1407, %v2042
        %2044 = vmatprep.mubr.f32.mxu0 0.0
        %2045 = vmatmul.mubr.f32.gmra.mrb[0].mxu0 %v1612
        %v2046 = vpop.f32.mrb[0].mxu0
        %v2047 = vadd.f32 %v1412, %v2046
        %v2048 = vpop.f32.mrb[0].mxu0
        %v2049 = vadd.f32 %v1412, %v2048
        %2050 = vmatprep.mubr.f32.mxu0 0.0
        %2051 = vmatmul.mubr.f32.gmra.mrb[0].mxu0 %v1615
        %v2052 = vpop.f32.mrb[0].mxu0
        %v2053 = vadd.f32 %v1417, %v2052
        %v2054 = vpop.f32.mrb[0].mxu0
        %v2055 = vadd.f32 %v1417, %v2054
        %2056 = vmatprep.mubr.f32.mxu0 0.0
        %2057 = vmatmul.mubr.f32.gmra.mrb[0].mxu0 %v1618
        %v2058 = vpop.f32.mrb[0].mxu0
        %v2059 = vadd.f32 %v1422, %v2058
        %v2060 = vpop.f32.mrb[0].mxu0
        %v2061 = vadd.f32 %v1422, %v2060
        %2062 = vmatprep.mubr.f32.mxu0 0.0
        %2063 = vmatmul.mubr.f32.gmra.mrb[0].mxu0 %v1621
        %v2064 = vpop.f32.mrb[0].mxu0
        %v2065 = vadd.f32 %v1427, %v2064
        %v2066 = vpop.f32.mrb[0].mxu0
        %v2067 = vadd.f32 %v1427, %v2066
        %2068 = vmatprep.mubr.f32.mxu0 0.0
        %2069 = vmatmul.mubr.f32.gmra.mrb[0].mxu0 %v1624
        %v2070 = vpop.f32.mrb[0].mxu0
        %v2071 = vadd.f32 %v1432, %v2070
        %v2072 = vpop.f32.mrb[0].mxu0
        %v2073 = vadd.f32 %v1432, %v2072
        %2074 = vdwg.mxu0
        %2075 = vmatprep.subr.mxu0 %v973
        %2076 = vmatpush1.msra.mxu0 %v972
        %2077 = vmatprep.subr.mxu0 %v977
        %2078 = vmatpush1.msra.mxu0 %v976
        %2079 = vmatprep.subr.mxu0 %v981
        %2080 = vmatpush1.msra.mxu0 %v980
        %2081 = vmatprep.subr.mxu0 %v985
        %2082 = vmatpush1.msra.mxu0 %v984
        %2083 = vmatprep.subr.mxu0 0.0
        %2084 = vmatpush1.msra.mxu0 0.0
        %2085 = vmatprep.subr.mxu0 0.0
        %2086 = vmatpush1.msra.mxu0 0.0
        %2087 = vmatprep.subr.mxu0 0.0
        %2088 = vmatpush1.msra.mxu0 0.0
        %2089 = vmatprep.subr.mxu0 0.0
        %2090 = vmatpush1.msra.mxu0 0.0
        %2091 = vmatprep.subr.mxu0 0.0
        %2092 = vmatpush1.msra.mxu0 0.0
        %2093 = vmatprep.subr.mxu0 0.0
        %2094 = vmatpush1.msra.mxu0 0.0
        %2095 = vmatprep.subr.mxu0 0.0
        %2096 = vmatpush1.msra.mxu0 0.0
        %2097 = vmatprep.subr.mxu0 0.0
        %2098 = vmatpush1.msra.mxu0 0.0
        %2099 = vmatprep.subr.mxu0 0.0
        %2100 = vmatpush1.msra.mxu0 0.0
        %2101 = vmatprep.subr.mxu0 0.0
        %2102 = vmatpush1.msra.mxu0 0.0
        %2103 = vmatprep.subr.mxu0 0.0
        %2104 = vmatpush1.msra.mxu0 0.0
        %2105 = vmatprep.subr.mxu0 0.0
        %2106 = vmatpush1.msra.mxu0 0.0
        %2107 = vmatprep.subr.mxu0 0.0
        %2108 = vmatpush1.msra.mxu0 0.0
        %2109 = vmatprep.subr.mxu0 0.0
        %2110 = vmatpush1.msra.mxu0 0.0
        %2111 = vmatprep.subr.mxu0 0.0
        %2112 = vmatpush1.msra.mxu0 0.0
        %2113 = vmatprep.subr.mxu0 0.0
        %2114 = vmatpush1.msra.mxu0 0.0
        %2115 = vmatprep.subr.mxu0 0.0
        %2116 = vmatpush1.msra.mxu0 0.0
        %2117 = vmatprep.subr.mxu0 0.0
        %2118 = vmatpush1.msra.mxu0 0.0
        %2119 = vmatprep.subr.mxu0 0.0
        %2120 = vmatpush1.msra.mxu0 0.0
        %2121 = vmatprep.subr.mxu0 0.0
        %2122 = vmatpush1.msra.mxu0 0.0
        %2123 = vmatprep.subr.mxu0 0.0
        %2124 = vmatpush1.msra.mxu0 0.0
        %2125 = vmatprep.subr.mxu0 0.0
        %2126 = vmatpush1.msra.mxu0 0.0
        %2127 = vmatprep.subr.mxu0 0.0
        %2128 = vmatpush1.msra.mxu0 0.0
        %2129 = vmatprep.subr.mxu0 0.0
        %2130 = vmatpush1.msra.mxu0 0.0
        %2131 = vmatprep.subr.mxu0 0.0
        %2132 = vmatpush1.msra.mxu0 0.0
        %2133 = vmatprep.subr.mxu0 0.0
        %2134 = vmatpush1.msra.mxu0 0.0
        %2135 = vmatprep.subr.mxu0 0.0
        %2136 = vmatpush1.msra.mxu0 0.0
        %2137 = vmatprep.subr.mxu0 0.0
        %2138 = vmatpush1.msra.mxu0 0.0
        %2139 = vmatprep.mubr.f32.mxu0 0.0
        %2140 = vmatmul.mubr.f32.gmra.mrb[0].mxu0 %v1435
        %v2141 = vpop.f32.mrb[0].mxu0
        %v2142 = vadd.f32 %v1117, %v2141
        %v2143 = vpop.f32.mrb[0].mxu0
        %v2144 = vadd.f32 %v1117, %v2143
        %2145 = vmatprep.mubr.f32.mxu0 0.0
        %2146 = vmatmul.mubr.f32.gmra.mrb[0].mxu0 %v1438
        %v2147 = vpop.f32.mrb[0].mxu0
        %v2148 = vadd.f32 %v1122, %v2147
        %v2149 = vpop.f32.mrb[0].mxu0
        %v2150 = vadd.f32 %v1122, %v2149
        %2151 = vmatprep.mubr.f32.mxu0 0.0
        %2152 = vmatmul.mubr.f32.gmra.mrb[0].mxu0 %v1441
        %v2153 = vpop.f32.mrb[0].mxu0
        %v2154 = vadd.f32 %v1127, %v2153
        %v2155 = vpop.f32.mrb[0].mxu0
        %v2156 = vadd.f32 %v1127, %v2155
        %2157 = vmatprep.mubr.f32.mxu0 0.0
        %2158 = vmatmul.mubr.f32.gmra.mrb[0].mxu0 %v1444
        %v2159 = vpop.f32.mrb[0].mxu0
        %v2160 = vadd.f32 %v1132, %v2159
        %v2161 = vpop.f32.mrb[0].mxu0
        %v2162 = vadd.f32 %v1132, %v2161
        %2163 = vmatprep.mubr.f32.mxu0 0.0
        %2164 = vmatmul.mubr.f32.gmra.mrb[0].mxu0 %v1447
        %v2165 = vpop.f32.mrb[0].mxu0
        %v2166 = vadd.f32 %v1137, %v2165
        %v2167 = vpop.f32.mrb[0].mxu0
        %v2168 = vadd.f32 %v1137, %v2167
        %2169 = vmatprep.mubr.f32.mxu0 0.0
        %2170 = vmatmul.mubr.f32.gmra.mrb[0].mxu0 %v1450
        %v2171 = vpop.f32.mrb[0].mxu0
        %v2172 = vadd.f32 %v1142, %v2171
        %v2173 = vpop.f32.mrb[0].mxu0
        %v2174 = vadd.f32 %v1142, %v2173
        %2175 = vmatprep.mubr.f32.mxu0 0.0
        %2176 = vmatmul.mubr.f32.gmra.mrb[0].mxu0 %v1453
        %v2177 = vpop.f32.mrb[0].mxu0
        %v2178 = vadd.f32 %v1147, %v2177
        %v2179 = vpop.f32.mrb[0].mxu0
        %v2180 = vadd.f32 %v1147, %v2179
        %2181 = vmatprep.mubr.f32.mxu0 0.0
        %2182 = vmatmul.mubr.f32.gmra.mrb[0].mxu0 %v1456
        %v2183 = vpop.f32.mrb[0].mxu0
        %v2184 = vadd.f32 %v1152, %v2183
        %v2185 = vpop.f32.mrb[0].mxu0
        %v2186 = vadd.f32 %v1152, %v2185
        %2187 = vmatprep.mubr.f32.mxu0 0.0
        %2188 = vmatmul.mubr.f32.gmra.mrb[0].mxu0 %v1459
        %v2189 = vpop.f32.mrb[0].mxu0
        %v2190 = vadd.f32 %v1157, %v2189
        %v2191 = vpop.f32.mrb[0].mxu0
        %v2192 = vadd.f32 %v1157, %v2191
        %2193 = vmatprep.mubr.f32.mxu0 0.0
        %2194 = vmatmul.mubr.f32.gmra.mrb[0].mxu0 %v1462
        %v2195 = vpop.f32.mrb[0].mxu0
        %v2196 = vadd.f32 %v1162, %v2195
        %v2197 = vpop.f32.mrb[0].mxu0
        %v2198 = vadd.f32 %v1162, %v2197
        %2199 = vmatprep.mubr.f32.mxu0 0.0
        %2200 = vmatmul.mubr.f32.gmra.mrb[0].mxu0 %v1465
        %v2201 = vpop.f32.mrb[0].mxu0
        %v2202 = vadd.f32 %v1167, %v2201
        %v2203 = vpop.f32.mrb[0].mxu0
        %v2204 = vadd.f32 %v1167, %v2203
        %2205 = vmatprep.mubr.f32.mxu0 0.0
        %2206 = vmatmul.mubr.f32.gmra.mrb[0].mxu0 %v1468
        %v2207 = vpop.f32.mrb[0].mxu0
        %v2208 = vadd.f32 %v1172, %v2207
        %v2209 = vpop.f32.mrb[0].mxu0
        %v2210 = vadd.f32 %v1172, %v2209
        %2211 = vmatprep.mubr.f32.mxu0 0.0
        %2212 = vmatmul.mubr.f32.gmra.mrb[0].mxu0 %v1471
        %v2213 = vpop.f32.mrb[0].mxu0
        %v2214 = vadd.f32 %v1177, %v2213
        %v2215 = vpop.f32.mrb[0].mxu0
        %v2216 = vadd.f32 %v1177, %v2215
        %2217 = vmatprep.mubr.f32.mxu0 0.0
        %2218 = vmatmul.mubr.f32.gmra.mrb[0].mxu0 %v1474
        %v2219 = vpop.f32.mrb[0].mxu0
        %v2220 = vadd.f32 %v1182, %v2219
        %v2221 = vpop.f32.mrb[0].mxu0
        %v2222 = vadd.f32 %v1182, %v2221
        %2223 = vmatprep.mubr.f32.mxu0 0.0
        %2224 = vmatmul.mubr.f32.gmra.mrb[0].mxu0 %v1477
        %v2225 = vpop.f32.mrb[0].mxu0
        %v2226 = vadd.f32 %v1187, %v2225
        %v2227 = vpop.f32.mrb[0].mxu0
        %v2228 = vadd.f32 %v1187, %v2227
        %2229 = vmatprep.mubr.f32.mxu0 0.0
        %2230 = vmatmul.mubr.f32.gmra.mrb[0].mxu0 %v1480
        %v2231 = vpop.f32.mrb[0].mxu0
        %v2232 = vadd.f32 %v1192, %v2231
        %v2233 = vpop.f32.mrb[0].mxu0
        %v2234 = vadd.f32 %v1192, %v2233
        %2235 = vmatprep.mubr.f32.mxu0 0.0
        %2236 = vmatmul.mubr.f32.gmra.mrb[0].mxu0 %v1483
        %v2237 = vpop.f32.mrb[0].mxu0
        %v2238 = vadd.f32 %v1197, %v2237
        %v2239 = vpop.f32.mrb[0].mxu0
        %v2240 = vadd.f32 %v1197, %v2239
        %2241 = vmatprep.mubr.f32.mxu0 0.0
        %2242 = vmatmul.mubr.f32.gmra.mrb[0].mxu0 %v1486
        %v2243 = vpop.f32.mrb[0].mxu0
        %v2244 = vadd.f32 %v1202, %v2243
        %v2245 = vpop.f32.mrb[0].mxu0
        %v2246 = vadd.f32 %v1202, %v2245
        %2247 = vmatprep.mubr.f32.mxu0 0.0
        %2248 = vmatmul.mubr.f32.gmra.mrb[0].mxu0 %v1489
        %v2249 = vpop.f32.mrb[0].mxu0
        %v2250 = vadd.f32 %v1207, %v2249
        %v2251 = vpop.f32.mrb[0].mxu0
        %v2252 = vadd.f32 %v1207, %v2251
        %2253 = vmatprep.mubr.f32.mxu0 0.0
        %2254 = vmatmul.mubr.f32.gmra.mrb[0].mxu0 %v1492
        %v2255 = vpop.f32.mrb[0].mxu0
        %v2256 = vadd.f32 %v1212, %v2255
        %v2257 = vpop.f32.mrb[0].mxu0
        %v2258 = vadd.f32 %v1212, %v2257
        %2259 = vmatprep.mubr.f32.mxu0 0.0
        %2260 = vmatmul.mubr.f32.gmra.mrb[0].mxu0 %v1495
        %v2261 = vpop.f32.mrb[0].mxu0
        %v2262 = vadd.f32 %v1217, %v2261
        %v2263 = vpop.f32.mrb[0].mxu0
        %v2264 = vadd.f32 %v1217, %v2263
        %2265 = vmatprep.mubr.f32.mxu0 0.0
        %2266 = vmatmul.mubr.f32.gmra.mrb[0].mxu0 %v1498
        %v2267 = vpop.f32.mrb[0].mxu0
        %v2268 = vadd.f32 %v1222, %v2267
        %v2269 = vpop.f32.mrb[0].mxu0
        %v2270 = vadd.f32 %v1222, %v2269
        %2271 = vmatprep.mubr.f32.mxu0 0.0
        %2272 = vmatmul.mubr.f32.gmra.mrb[0].mxu0 %v1501
        %v2273 = vpop.f32.mrb[0].mxu0
        %v2274 = vadd.f32 %v1227, %v2273
        %v2275 = vpop.f32.mrb[0].mxu0
        %v2276 = vadd.f32 %v1227, %v2275
        %2277 = vmatprep.mubr.f32.mxu0 0.0
        %2278 = vmatmul.mubr.f32.gmra.mrb[0].mxu0 %v1504
        %v2279 = vpop.f32.mrb[0].mxu0
        %v2280 = vadd.f32 %v1232, %v2279
        %v2281 = vpop.f32.mrb[0].mxu0
        %v2282 = vadd.f32 %v1232, %v2281
        %2283 = vmatprep.mubr.f32.mxu0 0.0
        %2284 = vmatmul.mubr.f32.gmra.mrb[0].mxu0 %v1507
        %v2285 = vpop.f32.mrb[0].mxu0
        %v2286 = vadd.f32 %v1237, %v2285
        %v2287 = vpop.f32.mrb[0].mxu0
        %v2288 = vadd.f32 %v1237, %v2287
        %2289 = vmatprep.mubr.f32.mxu0 0.0
        %2290 = vmatmul.mubr.f32.gmra.mrb[0].mxu0 %v1510
        %v2291 = vpop.f32.mrb[0].mxu0
        %v2292 = vadd.f32 %v1242, %v2291
        %v2293 = vpop.f32.mrb[0].mxu0
        %v2294 = vadd.f32 %v1242, %v2293
        %2295 = vmatprep.mubr.f32.mxu0 0.0
        %2296 = vmatmul.mubr.f32.gmra.mrb[0].mxu0 %v1513
        %v2297 = vpop.f32.mrb[0].mxu0
        %v2298 = vadd.f32 %v1247, %v2297
        %v2299 = vpop.f32.mrb[0].mxu0
        %v2300 = vadd.f32 %v1247, %v2299
        %2301 = vmatprep.mubr.f32.mxu0 0.0
        %2302 = vmatmul.mubr.f32.gmra.mrb[0].mxu0 %v1516
        %v2303 = vpop.f32.mrb[0].mxu0
        %v2304 = vadd.f32 %v1252, %v2303
        %v2305 = vpop.f32.mrb[0].mxu0
        %v2306 = vadd.f32 %v1252, %v2305
        %2307 = vmatprep.mubr.f32.mxu0 0.0
        %2308 = vmatmul.mubr.f32.gmra.mrb[0].mxu0 %v1519
        %v2309 = vpop.f32.mrb[0].mxu0
        %v2310 = vadd.f32 %v1257, %v2309
        %v2311 = vpop.f32.mrb[0].mxu0
        %v2312 = vadd.f32 %v1257, %v2311
        %2313 = vmatprep.mubr.f32.mxu0 0.0
        %2314 = vmatmul.mubr.f32.gmra.mrb[0].mxu0 %v1522
        %v2315 = vpop.f32.mrb[0].mxu0
        %v2316 = vadd.f32 %v1262, %v2315
        %v2317 = vpop.f32.mrb[0].mxu0
        %v2318 = vadd.f32 %v1262, %v2317
        %2319 = vmatprep.mubr.f32.mxu0 0.0
        %2320 = vmatmul.mubr.f32.gmra.mrb[0].mxu0 %v1525
        %v2321 = vpop.f32.mrb[0].mxu0
        %v2322 = vadd.f32 %v1267, %v2321
        %v2323 = vpop.f32.mrb[0].mxu0
        %v2324 = vadd.f32 %v1267, %v2323
        %2325 = vmatprep.mubr.f32.mxu0 0.0
        %2326 = vmatmul.mubr.f32.gmra.mrb[0].mxu0 %v1528
        %v2327 = vpop.f32.mrb[0].mxu0
        %v2328 = vadd.f32 %v1272, %v2327
        %v2329 = vpop.f32.mrb[0].mxu0
        %v2330 = vadd.f32 %v1272, %v2329
        %2331 = vmatprep.mubr.f32.mxu0 0.0
        %2332 = vmatmul.mubr.f32.gmra.mrb[0].mxu0 %v1531
        %v2333 = vpop.f32.mrb[0].mxu0
        %v2334 = vadd.f32 %v1277, %v2333
        %v2335 = vpop.f32.mrb[0].mxu0
        %v2336 = vadd.f32 %v1277, %v2335
        %2337 = vmatprep.mubr.f32.mxu0 0.0
        %2338 = vmatmul.mubr.f32.gmra.mrb[0].mxu0 %v1534
        %v2339 = vpop.f32.mrb[0].mxu0
        %v2340 = vadd.f32 %v1282, %v2339
        %v2341 = vpop.f32.mrb[0].mxu0
        %v2342 = vadd.f32 %v1282, %v2341
        %2343 = vmatprep.mubr.f32.mxu0 0.0
        %2344 = vmatmul.mubr.f32.gmra.mrb[0].mxu0 %v1537
        %v2345 = vpop.f32.mrb[0].mxu0
        %v2346 = vadd.f32 %v1287, %v2345
        %v2347 = vpop.f32.mrb[0].mxu0
        %v2348 = vadd.f32 %v1287, %v2347
        %2349 = vmatprep.mubr.f32.mxu0 0.0
        %2350 = vmatmul.mubr.f32.gmra.mrb[0].mxu0 %v1540
        %v2351 = vpop.f32.mrb[0].mxu0
        %v2352 = vadd.f32 %v1292, %v2351
        %v2353 = vpop.f32.mrb[0].mxu0
        %v2354 = vadd.f32 %v1292, %v2353
        %2355 = vmatprep.mubr.f32.mxu0 0.0
        %2356 = vmatmul.mubr.f32.gmra.mrb[0].mxu0 %v1543
        %v2357 = vpop.f32.mrb[0].mxu0
        %v2358 = vadd.f32 %v1297, %v2357
        %v2359 = vpop.f32.mrb[0].mxu0
        %v2360 = vadd.f32 %v1297, %v2359
        %2361 = vmatprep.mubr.f32.mxu0 0.0
        %2362 = vmatmul.mubr.f32.gmra.mrb[0].mxu0 %v1546
        %v2363 = vpop.f32.mrb[0].mxu0
        %v2364 = vadd.f32 %v1302, %v2363
        %v2365 = vpop.f32.mrb[0].mxu0
        %v2366 = vadd.f32 %v1302, %v2365
        %2367 = vmatprep.mubr.f32.mxu0 0.0
        %2368 = vmatmul.mubr.f32.gmra.mrb[0].mxu0 %v1549
        %v2369 = vpop.f32.mrb[0].mxu0
        %v2370 = vadd.f32 %v1307, %v2369
        %v2371 = vpop.f32.mrb[0].mxu0
        %v2372 = vadd.f32 %v1307, %v2371
        %2373 = vmatprep.mubr.f32.mxu0 0.0
        %2374 = vmatmul.mubr.f32.gmra.mrb[0].mxu0 %v1552
        %v2375 = vpop.f32.mrb[0].mxu0
        %v2376 = vadd.f32 %v1312, %v2375
        %v2377 = vpop.f32.mrb[0].mxu0
        %v2378 = vadd.f32 %v1312, %v2377
        %2379 = vmatprep.mubr.f32.mxu0 0.0
        %2380 = vmatmul.mubr.f32.gmra.mrb[0].mxu0 %v1555
        %v2381 = vpop.f32.mrb[0].mxu0
        %v2382 = vadd.f32 %v1317, %v2381
        %v2383 = vpop.f32.mrb[0].mxu0
        %v2384 = vadd.f32 %v1317, %v2383
        %2385 = vmatprep.mubr.f32.mxu0 0.0
        %2386 = vmatmul.mubr.f32.gmra.mrb[0].mxu0 %v1558
        %v2387 = vpop.f32.mrb[0].mxu0
        %v2388 = vadd.f32 %v1322, %v2387
        %v2389 = vpop.f32.mrb[0].mxu0
        %v2390 = vadd.f32 %v1322, %v2389
        %2391 = vmatprep.mubr.f32.mxu0 0.0
        %2392 = vmatmul.mubr.f32.gmra.mrb[0].mxu0 %v1561
        %v2393 = vpop.f32.mrb[0].mxu0
        %v2394 = vadd.f32 %v1327, %v2393
        %v2395 = vpop.f32.mrb[0].mxu0
        %v2396 = vadd.f32 %v1327, %v2395
        %2397 = vmatprep.mubr.f32.mxu0 0.0
        %2398 = vmatmul.mubr.f32.gmra.mrb[0].mxu0 %v1564
        %v2399 = vpop.f32.mrb[0].mxu0
        %v2400 = vadd.f32 %v1332, %v2399
        %v2401 = vpop.f32.mrb[0].mxu0
        %v2402 = vadd.f32 %v1332, %v2401
        %2403 = vmatprep.mubr.f32.mxu0 0.0
        %2404 = vmatmul.mubr.f32.gmra.mrb[0].mxu0 %v1567
        %v2405 = vpop.f32.mrb[0].mxu0
        %v2406 = vadd.f32 %v1337, %v2405
        %v2407 = vpop.f32.mrb[0].mxu0
        %v2408 = vadd.f32 %v1337, %v2407
        %2409 = vmatprep.mubr.f32.mxu0 0.0
        %2410 = vmatmul.mubr.f32.gmra.mrb[0].mxu0 %v1570
        %v2411 = vpop.f32.mrb[0].mxu0
        %v2412 = vadd.f32 %v1342, %v2411
        %v2413 = vpop.f32.mrb[0].mxu0
        %v2414 = vadd.f32 %v1342, %v2413
        %2415 = vmatprep.mubr.f32.mxu0 0.0
        %2416 = vmatmul.mubr.f32.gmra.mrb[0].mxu0 %v1573
        %v2417 = vpop.f32.mrb[0].mxu0
        %v2418 = vadd.f32 %v1347, %v2417
        %v2419 = vpop.f32.mrb[0].mxu0
        %v2420 = vadd.f32 %v1347, %v2419
        %2421 = vmatprep.mubr.f32.mxu0 0.0
        %2422 = vmatmul.mubr.f32.gmra.mrb[0].mxu0 %v1576
        %v2423 = vpop.f32.mrb[0].mxu0
        %v2424 = vadd.f32 %v1352, %v2423
        %v2425 = vpop.f32.mrb[0].mxu0
        %v2426 = vadd.f32 %v1352, %v2425
        %2427 = vmatprep.mubr.f32.mxu0 0.0
        %2428 = vmatmul.mubr.f32.gmra.mrb[0].mxu0 %v1579
        %v2429 = vpop.f32.mrb[0].mxu0
        %v2430 = vadd.f32 %v1357, %v2429
        %v2431 = vpop.f32.mrb[0].mxu0
        %v2432 = vadd.f32 %v1357, %v2431
        %2433 = vmatprep.mubr.f32.mxu0 0.0
        %2434 = vmatmul.mubr.f32.gmra.mrb[0].mxu0 %v1582
        %v2435 = vpop.f32.mrb[0].mxu0
        %v2436 = vadd.f32 %v1362, %v2435
        %v2437 = vpop.f32.mrb[0].mxu0
        %v2438 = vadd.f32 %v1362, %v2437
        %2439 = vmatprep.mubr.f32.mxu0 0.0
        %2440 = vmatmul.mubr.f32.gmra.mrb[0].mxu0 %v1585
        %v2441 = vpop.f32.mrb[0].mxu0
        %v2442 = vadd.f32 %v1367, %v2441
        %v2443 = vpop.f32.mrb[0].mxu0
        %v2444 = vadd.f32 %v1367, %v2443
        %2445 = vmatprep.mubr.f32.mxu0 0.0
        %2446 = vmatmul.mubr.f32.gmra.mrb[0].mxu0 %v1588
        %v2447 = vpop.f32.mrb[0].mxu0
        %v2448 = vadd.f32 %v1372, %v2447
        %v2449 = vpop.f32.mrb[0].mxu0
        %v2450 = vadd.f32 %v1372, %v2449
        %2451 = vmatprep.mubr.f32.mxu0 0.0
        %2452 = vmatmul.mubr.f32.gmra.mrb[0].mxu0 %v1591
        %v2453 = vpop.f32.mrb[0].mxu0
        %v2454 = vadd.f32 %v1377, %v2453
        %v2455 = vpop.f32.mrb[0].mxu0
        %v2456 = vadd.f32 %v1377, %v2455
        %2457 = vmatprep.mubr.f32.mxu0 0.0
        %2458 = vmatmul.mubr.f32.gmra.mrb[0].mxu0 %v1594
        %v2459 = vpop.f32.mrb[0].mxu0
        %v2460 = vadd.f32 %v1382, %v2459
        %v2461 = vpop.f32.mrb[0].mxu0
        %v2462 = vadd.f32 %v1382, %v2461
        %2463 = vmatprep.mubr.f32.mxu0 0.0
        %2464 = vmatmul.mubr.f32.gmra.mrb[0].mxu0 %v1597
        %v2465 = vpop.f32.mrb[0].mxu0
        %v2466 = vadd.f32 %v1387, %v2465
        %v2467 = vpop.f32.mrb[0].mxu0
        %v2468 = vadd.f32 %v1387, %v2467
        %2469 = vmatprep.mubr.f32.mxu0 0.0
        %2470 = vmatmul.mubr.f32.gmra.mrb[0].mxu0 %v1600
        %v2471 = vpop.f32.mrb[0].mxu0
        %v2472 = vadd.f32 %v1392, %v2471
        %v2473 = vpop.f32.mrb[0].mxu0
        %v2474 = vadd.f32 %v1392, %v2473
        %2475 = vmatprep.mubr.f32.mxu0 0.0
        %2476 = vmatmul.mubr.f32.gmra.mrb[0].mxu0 %v1603
        %v2477 = vpop.f32.mrb[0].mxu0
        %v2478 = vadd.f32 %v1397, %v2477
        %v2479 = vpop.f32.mrb[0].mxu0
        %v2480 = vadd.f32 %v1397, %v2479
        %2481 = vmatprep.mubr.f32.mxu0 0.0
        %2482 = vmatmul.mubr.f32.gmra.mrb[0].mxu0 %v1606
        %v2483 = vpop.f32.mrb[0].mxu0
        %v2484 = vadd.f32 %v1402, %v2483
        %v2485 = vpop.f32.mrb[0].mxu0
        %v2486 = vadd.f32 %v1402, %v2485
        %2487 = vmatprep.mubr.f32.mxu0 0.0
        %2488 = vmatmul.mubr.f32.gmra.mrb[0].mxu0 %v1609
        %v2489 = vpop.f32.mrb[0].mxu0
        %v2490 = vadd.f32 %v1407, %v2489
        %v2491 = vpop.f32.mrb[0].mxu0
        %v2492 = vadd.f32 %v1407, %v2491
        %2493 = vmatprep.mubr.f32.mxu0 0.0
        %2494 = vmatmul.mubr.f32.gmra.mrb[0].mxu0 %v1612
        %v2495 = vpop.f32.mrb[0].mxu0
        %v2496 = vadd.f32 %v1412, %v2495
        %v2497 = vpop.f32.mrb[0].mxu0
        %v2498 = vadd.f32 %v1412, %v2497
        %2499 = vmatprep.mubr.f32.mxu0 0.0
        %2500 = vmatmul.mubr.f32.gmra.mrb[0].mxu0 %v1615
        %v2501 = vpop.f32.mrb[0].mxu0
        %v2502 = vadd.f32 %v1417, %v2501
        %v2503 = vpop.f32.mrb[0].mxu0
        %v2504 = vadd.f32 %v1417, %v2503
        %2505 = vmatprep.mubr.f32.mxu0 0.0
        %2506 = vmatmul.mubr.f32.gmra.mrb[0].mxu0 %v1618
        %v2507 = vpop.f32.mrb[0].mxu0
        %v2508 = vadd.f32 %v1422, %v2507
        %v2509 = vpop.f32.mrb[0].mxu0
        %v2510 = vadd.f32 %v1422, %v2509
        %2511 = vmatprep.mubr.f32.mxu0 0.0
        %2512 = vmatmul.mubr.f32.gmra.mrb[0].mxu0 %v1621
        %v2513 = vpop.f32.mrb[0].mxu0
        %v2514 = vadd.f32 %v1427, %v2513
        %v2515 = vpop.f32.mrb[0].mxu0
        %v2516 = vadd.f32 %v1427, %v2515
        %2517 = vmatprep.mubr.f32.mxu0 0.0
        %2518 = vmatmul.mubr.f32.gmra.mrb[0].mxu0 %v1624
        %v2519 = vpop.f32.mrb[0].mxu0
        %v2520 = vadd.f32 %v1432, %v2519
        %v2521 = vpop.f32.mrb[0].mxu0
        %v2522 = vadd.f32 %v1432, %v2521
        %2523 = vdwg.mxu0
        %2524 = vst [vmem:[%s455] sm:$0xff] %v1693
        %2525 = vst [vmem:[%s455 + $0x8] sm:$0xff] %v1695
        %2526 = vst [vmem:[%s455 + $0x10] sm:$0xff] %v2142
        %vm2527 = vcmask 818176
        %2528 = vst.msk [vmem:[%s455 + $0x18] sm:$0xff] %vm2527, %v2144
        %2529 = vst [vmem:[%s455 + $0x20] sm:$0xff] %v1699
        %2530 = vst [vmem:[%s455 + $0x28] sm:$0xff] %v1701
        %2531 = vst [vmem:[%s455 + $0x30] sm:$0xff] %v2148
        %2532 = vst.msk [vmem:[%s455 + $0x38] sm:$0xff] %vm2527, %v2150
        %2533 = vst [vmem:[%s455 + $0x40] sm:$0xff] %v1705
        %2534 = vst [vmem:[%s455 + $0x48] sm:$0xff] %v1707
        %2535 = vst [vmem:[%s455 + $0x50] sm:$0xff] %v2154
        %2536 = vst.msk [vmem:[%s455 + $0x58] sm:$0xff] %vm2527, %v2156
        %2537 = vst [vmem:[%s455 + $0x60] sm:$0xff] %v1711
        %2538 = vst [vmem:[%s455 + $0x68] sm:$0xff] %v1713
        %2539 = vst [vmem:[%s455 + $0x70] sm:$0xff] %v2160
        %2540 = vst.msk [vmem:[%s455 + $0x78] sm:$0xff] %vm2527, %v2162
        %2541 = vst [vmem:[%s455 + $0x80] sm:$0xff] %v1717
        %2542 = vst [vmem:[%s455 + $0x88] sm:$0xff] %v1719
        %2543 = vst [vmem:[%s455 + $0x90] sm:$0xff] %v2166
        %2544 = vst.msk [vmem:[%s455 + $0x98] sm:$0xff] %vm2527, %v2168
        %2545 = vst [vmem:[%s455 + $0xa0] sm:$0xff] %v1723
        %2546 = vst [vmem:[%s455 + $0xa8] sm:$0xff] %v1725
        %2547 = vst [vmem:[%s455 + $0xb0] sm:$0xff] %v2172
        %2548 = vst.msk [vmem:[%s455 + $0xb8] sm:$0xff] %vm2527, %v2174
        %2549 = vst [vmem:[%s455 + $0xc0] sm:$0xff] %v1729
        %2550 = vst [vmem:[%s455 + $0xc8] sm:$0xff] %v1731
        %2551 = vst [vmem:[%s455 + $0xd0] sm:$0xff] %v2178
        %2552 = vst.msk [vmem:[%s455 + $0xd8] sm:$0xff] %vm2527, %v2180
        %2553 = vst [vmem:[%s455 + $0xe0] sm:$0xff] %v1735
        %2554 = vst [vmem:[%s455 + $0xe8] sm:$0xff] %v1737
        %2555 = vst [vmem:[%s455 + $0xf0] sm:$0xff] %v2184
        %2556 = vst.msk [vmem:[%s455 + $0xf8] sm:$0xff] %vm2527, %v2186
        %2557 = vst [vmem:[%s455 + $0x100] sm:$0xff] %v1741
        %2558 = vst [vmem:[%s455 + $0x108] sm:$0xff] %v1743
        %2559 = vst [vmem:[%s455 + $0x110] sm:$0xff] %v2190
        %2560 = vst.msk [vmem:[%s455 + $0x118] sm:$0xff] %vm2527, %v2192
        %2561 = vst [vmem:[%s455 + $0x120] sm:$0xff] %v1747
        %2562 = vst [vmem:[%s455 + $0x128] sm:$0xff] %v1749
        %2563 = vst [vmem:[%s455 + $0x130] sm:$0xff] %v2196
        %2564 = vst.msk [vmem:[%s455 + $0x138] sm:$0xff] %vm2527, %v2198
        %2565 = vst [vmem:[%s455 + $0x140] sm:$0xff] %v1753
        %2566 = vst [vmem:[%s455 + $0x148] sm:$0xff] %v1755
        %2567 = vst [vmem:[%s455 + $0x150] sm:$0xff] %v2202
        %2568 = vst.msk [vmem:[%s455 + $0x158] sm:$0xff] %vm2527, %v2204
        %2569 = vst [vmem:[%s455 + $0x160] sm:$0xff] %v1759
        %2570 = vst [vmem:[%s455 + $0x168] sm:$0xff] %v1761
        %2571 = vst [vmem:[%s455 + $0x170] sm:$0xff] %v2208
        %2572 = vst.msk [vmem:[%s455 + $0x178] sm:$0xff] %vm2527, %v2210
        %2573 = vst [vmem:[%s455 + $0x180] sm:$0xff] %v1765
        %2574 = vst [vmem:[%s455 + $0x188] sm:$0xff] %v1767
        %2575 = vst [vmem:[%s455 + $0x190] sm:$0xff] %v2214
        %2576 = vst.msk [vmem:[%s455 + $0x198] sm:$0xff] %vm2527, %v2216
        %2577 = vst [vmem:[%s455 + $0x1a0] sm:$0xff] %v1771
        %2578 = vst [vmem:[%s455 + $0x1a8] sm:$0xff] %v1773
        %2579 = vst [vmem:[%s455 + $0x1b0] sm:$0xff] %v2220
        %2580 = vst.msk [vmem:[%s455 + $0x1b8] sm:$0xff] %vm2527, %v2222
        %2581 = vst [vmem:[%s455 + $0x1c0] sm:$0xff] %v1777
        %2582 = vst [vmem:[%s455 + $0x1c8] sm:$0xff] %v1779
        %2583 = vst [vmem:[%s455 + $0x1d0] sm:$0xff] %v2226
        %2584 = vst.msk [vmem:[%s455 + $0x1d8] sm:$0xff] %vm2527, %v2228
        %2585 = vst [vmem:[%s455 + $0x1e0] sm:$0xff] %v1783
        %2586 = vst [vmem:[%s455 + $0x1e8] sm:$0xff] %v1785
        %2587 = vst [vmem:[%s455 + $0x1f0] sm:$0xff] %v2232
        %2588 = vst.msk [vmem:[%s455 + $0x1f8] sm:$0xff] %vm2527, %v2234
        %2589 = vst [vmem:[%s455 + $0x200] sm:$0xff] %v1789
        %2590 = vst [vmem:[%s455 + $0x208] sm:$0xff] %v1791
        %2591 = vst [vmem:[%s455 + $0x210] sm:$0xff] %v2238
        %2592 = vst.msk [vmem:[%s455 + $0x218] sm:$0xff] %vm2527, %v2240
        %2593 = vst [vmem:[%s455 + $0x220] sm:$0xff] %v1795
        %2594 = vst [vmem:[%s455 + $0x228] sm:$0xff] %v1797
        %2595 = vst [vmem:[%s455 + $0x230] sm:$0xff] %v2244
        %2596 = vst.msk [vmem:[%s455 + $0x238] sm:$0xff] %vm2527, %v2246
        %2597 = vst [vmem:[%s455 + $0x240] sm:$0xff] %v1801
        %2598 = vst [vmem:[%s455 + $0x248] sm:$0xff] %v1803
        %2599 = vst [vmem:[%s455 + $0x250] sm:$0xff] %v2250
        %2600 = vst.msk [vmem:[%s455 + $0x258] sm:$0xff] %vm2527, %v2252
        %2601 = vst [vmem:[%s455 + $0x260] sm:$0xff] %v1807
        %2602 = vst [vmem:[%s455 + $0x268] sm:$0xff] %v1809
        %2603 = vst [vmem:[%s455 + $0x270] sm:$0xff] %v2256
        %2604 = vst.msk [vmem:[%s455 + $0x278] sm:$0xff] %vm2527, %v2258
        %2605 = vst [vmem:[%s455 + $0x280] sm:$0xff] %v1813
        %2606 = vst [vmem:[%s455 + $0x288] sm:$0xff] %v1815
        %2607 = vst [vmem:[%s455 + $0x290] sm:$0xff] %v2262
        %2608 = vst.msk [vmem:[%s455 + $0x298] sm:$0xff] %vm2527, %v2264
        %2609 = vst [vmem:[%s455 + $0x2a0] sm:$0xff] %v1819
        %2610 = vst [vmem:[%s455 + $0x2a8] sm:$0xff] %v1821
        %2611 = vst [vmem:[%s455 + $0x2b0] sm:$0xff] %v2268
        %2612 = vst.msk [vmem:[%s455 + $0x2b8] sm:$0xff] %vm2527, %v2270
        %2613 = vst [vmem:[%s455 + $0x2c0] sm:$0xff] %v1825
        %2614 = vst [vmem:[%s455 + $0x2c8] sm:$0xff] %v1827
        %2615 = vst [vmem:[%s455 + $0x2d0] sm:$0xff] %v2274
        %2616 = vst.msk [vmem:[%s455 + $0x2d8] sm:$0xff] %vm2527, %v2276
        %2617 = vst [vmem:[%s455 + $0x2e0] sm:$0xff] %v1831
        %2618 = vst [vmem:[%s455 + $0x2e8] sm:$0xff] %v1833
        %2619 = vst [vmem:[%s455 + $0x2f0] sm:$0xff] %v2280
        %2620 = vst.msk [vmem:[%s455 + $0x2f8] sm:$0xff] %vm2527, %v2282
        %2621 = vst [vmem:[%s455 + $0x300] sm:$0xff] %v1837
        %2622 = vst [vmem:[%s455 + $0x308] sm:$0xff] %v1839
        %2623 = vst [vmem:[%s455 + $0x310] sm:$0xff] %v2286
        %2624 = vst.msk [vmem:[%s455 + $0x318] sm:$0xff] %vm2527, %v2288
        %2625 = vst [vmem:[%s455 + $0x320] sm:$0xff] %v1843
        %2626 = vst [vmem:[%s455 + $0x328] sm:$0xff] %v1845
        %2627 = vst [vmem:[%s455 + $0x330] sm:$0xff] %v2292
        %2628 = vst.msk [vmem:[%s455 + $0x338] sm:$0xff] %vm2527, %v2294
        %2629 = vst [vmem:[%s455 + $0x340] sm:$0xff] %v1849
        %2630 = vst [vmem:[%s455 + $0x348] sm:$0xff] %v1851
        %2631 = vst [vmem:[%s455 + $0x350] sm:$0xff] %v2298
        %2632 = vst.msk [vmem:[%s455 + $0x358] sm:$0xff] %vm2527, %v2300
        %2633 = vst [vmem:[%s455 + $0x360] sm:$0xff] %v1855
        %2634 = vst [vmem:[%s455 + $0x368] sm:$0xff] %v1857
        %2635 = vst [vmem:[%s455 + $0x370] sm:$0xff] %v2304
        %2636 = vst.msk [vmem:[%s455 + $0x378] sm:$0xff] %vm2527, %v2306
        %2637 = vst [vmem:[%s455 + $0x380] sm:$0xff] %v1861
        %2638 = vst [vmem:[%s455 + $0x388] sm:$0xff] %v1863
        %2639 = vst [vmem:[%s455 + $0x390] sm:$0xff] %v2310
        %2640 = vst.msk [vmem:[%s455 + $0x398] sm:$0xff] %vm2527, %v2312
        %2641 = vst [vmem:[%s455 + $0x3a0] sm:$0xff] %v1867
        %2642 = vst [vmem:[%s455 + $0x3a8] sm:$0xff] %v1869
        %2643 = vst [vmem:[%s455 + $0x3b0] sm:$0xff] %v2316
        %2644 = vst.msk [vmem:[%s455 + $0x3b8] sm:$0xff] %vm2527, %v2318
        %2645 = vst [vmem:[%s455 + $0x3c0] sm:$0xff] %v1873
        %2646 = vst [vmem:[%s455 + $0x3c8] sm:$0xff] %v1875
        %2647 = vst [vmem:[%s455 + $0x3d0] sm:$0xff] %v2322
        %2648 = vst.msk [vmem:[%s455 + $0x3d8] sm:$0xff] %vm2527, %v2324
        %2649 = vst [vmem:[%s455 + $0x3e0] sm:$0xff] %v1879
        %2650 = vst [vmem:[%s455 + $0x3e8] sm:$0xff] %v1881
        %2651 = vst [vmem:[%s455 + $0x3f0] sm:$0xff] %v2328
        %2652 = vst.msk [vmem:[%s455 + $0x3f8] sm:$0xff] %vm2527, %v2330
        %2653 = vst [vmem:[%s455 + $0x400] sm:$0xff] %v1885
        %2654 = vst [vmem:[%s455 + $0x408] sm:$0xff] %v1887
        %2655 = vst [vmem:[%s455 + $0x410] sm:$0xff] %v2334
        %2656 = vst.msk [vmem:[%s455 + $0x418] sm:$0xff] %vm2527, %v2336
        %2657 = vst [vmem:[%s455 + $0x420] sm:$0xff] %v1891
        %2658 = vst [vmem:[%s455 + $0x428] sm:$0xff] %v1893
        %2659 = vst [vmem:[%s455 + $0x430] sm:$0xff] %v2340
        %2660 = vst.msk [vmem:[%s455 + $0x438] sm:$0xff] %vm2527, %v2342
        %2661 = vst [vmem:[%s455 + $0x440] sm:$0xff] %v1897
        %2662 = vst [vmem:[%s455 + $0x448] sm:$0xff] %v1899
        %2663 = vst [vmem:[%s455 + $0x450] sm:$0xff] %v2346
        %2664 = vst.msk [vmem:[%s455 + $0x458] sm:$0xff] %vm2527, %v2348
        %2665 = vst [vmem:[%s455 + $0x460] sm:$0xff] %v1903
        %2666 = vst [vmem:[%s455 + $0x468] sm:$0xff] %v1905
        %2667 = vst [vmem:[%s455 + $0x470] sm:$0xff] %v2352
        %2668 = vst.msk [vmem:[%s455 + $0x478] sm:$0xff] %vm2527, %v2354
        %2669 = vst [vmem:[%s455 + $0x480] sm:$0xff] %v1909
        %2670 = vst [vmem:[%s455 + $0x488] sm:$0xff] %v1911
        %2671 = vst [vmem:[%s455 + $0x490] sm:$0xff] %v2358
        %2672 = vst.msk [vmem:[%s455 + $0x498] sm:$0xff] %vm2527, %v2360
        %2673 = vst [vmem:[%s455 + $0x4a0] sm:$0xff] %v1915
        %2674 = vst [vmem:[%s455 + $0x4a8] sm:$0xff] %v1917
        %2675 = vst [vmem:[%s455 + $0x4b0] sm:$0xff] %v2364
        %2676 = vst.msk [vmem:[%s455 + $0x4b8] sm:$0xff] %vm2527, %v2366
        %2677 = vst [vmem:[%s455 + $0x4c0] sm:$0xff] %v1921
        %2678 = vst [vmem:[%s455 + $0x4c8] sm:$0xff] %v1923
        %2679 = vst [vmem:[%s455 + $0x4d0] sm:$0xff] %v2370
        %2680 = vst.msk [vmem:[%s455 + $0x4d8] sm:$0xff] %vm2527, %v2372
        %2681 = vst [vmem:[%s455 + $0x4e0] sm:$0xff] %v1927
        %2682 = vst [vmem:[%s455 + $0x4e8] sm:$0xff] %v1929
        %2683 = vst [vmem:[%s455 + $0x4f0] sm:$0xff] %v2376
        %2684 = vst.msk [vmem:[%s455 + $0x4f8] sm:$0xff] %vm2527, %v2378
        %2685 = vst [vmem:[%s455 + $0x500] sm:$0xff] %v1933
        %2686 = vst [vmem:[%s455 + $0x508] sm:$0xff] %v1935
        %2687 = vst [vmem:[%s455 + $0x510] sm:$0xff] %v2382
        %2688 = vst.msk [vmem:[%s455 + $0x518] sm:$0xff] %vm2527, %v2384
        %2689 = vst [vmem:[%s455 + $0x520] sm:$0xff] %v1939
        %2690 = vst [vmem:[%s455 + $0x528] sm:$0xff] %v1941
        %2691 = vst [vmem:[%s455 + $0x530] sm:$0xff] %v2388
        %2692 = vst.msk [vmem:[%s455 + $0x538] sm:$0xff] %vm2527, %v2390
        %2693 = vst [vmem:[%s455 + $0x540] sm:$0xff] %v1945
        %2694 = vst [vmem:[%s455 + $0x548] sm:$0xff] %v1947
        %2695 = vst [vmem:[%s455 + $0x550] sm:$0xff] %v2394
        %2696 = vst.msk [vmem:[%s455 + $0x558] sm:$0xff] %vm2527, %v2396
        %2697 = vst [vmem:[%s455 + $0x560] sm:$0xff] %v1951
        %2698 = vst [vmem:[%s455 + $0x568] sm:$0xff] %v1953
        %2699 = vst [vmem:[%s455 + $0x570] sm:$0xff] %v2400
        %2700 = vst.msk [vmem:[%s455 + $0x578] sm:$0xff] %vm2527, %v2402
        %2701 = vst [vmem:[%s455 + $0x580] sm:$0xff] %v1957
        %2702 = vst [vmem:[%s455 + $0x588] sm:$0xff] %v1959
        %2703 = vst [vmem:[%s455 + $0x590] sm:$0xff] %v2406
        %2704 = vst.msk [vmem:[%s455 + $0x598] sm:$0xff] %vm2527, %v2408
        %2705 = vst [vmem:[%s455 + $0x5a0] sm:$0xff] %v1963
        %2706 = vst [vmem:[%s455 + $0x5a8] sm:$0xff] %v1965
        %2707 = vst [vmem:[%s455 + $0x5b0] sm:$0xff] %v2412
        %2708 = vst.msk [vmem:[%s455 + $0x5b8] sm:$0xff] %vm2527, %v2414
        %2709 = vst [vmem:[%s455 + $0x5c0] sm:$0xff] %v1969
        %2710 = vst [vmem:[%s455 + $0x5c8] sm:$0xff] %v1971
        %2711 = vst [vmem:[%s455 + $0x5d0] sm:$0xff] %v2418
        %2712 = vst.msk [vmem:[%s455 + $0x5d8] sm:$0xff] %vm2527, %v2420
        %2713 = vst [vmem:[%s455 + $0x5e0] sm:$0xff] %v1975
        %2714 = vst [vmem:[%s455 + $0x5e8] sm:$0xff] %v1977
        %2715 = vst [vmem:[%s455 + $0x5f0] sm:$0xff] %v2424
        %2716 = vst.msk [vmem:[%s455 + $0x5f8] sm:$0xff] %vm2527, %v2426
        %2717 = vst [vmem:[%s455 + $0x600] sm:$0xff] %v1981
        %2718 = vst [vmem:[%s455 + $0x608] sm:$0xff] %v1983
        %2719 = vst [vmem:[%s455 + $0x610] sm:$0xff] %v2430
        %2720 = vst.msk [vmem:[%s455 + $0x618] sm:$0xff] %vm2527, %v2432
        %2721 = vst [vmem:[%s455 + $0x620] sm:$0xff] %v1987
        %2722 = vst [vmem:[%s455 + $0x628] sm:$0xff] %v1989
        %2723 = vst [vmem:[%s455 + $0x630] sm:$0xff] %v2436
        %2724 = vst.msk [vmem:[%s455 + $0x638] sm:$0xff] %vm2527, %v2438
        %2725 = vst [vmem:[%s455 + $0x640] sm:$0xff] %v1993
        %2726 = vst [vmem:[%s455 + $0x648] sm:$0xff] %v1995
        %2727 = vst [vmem:[%s455 + $0x650] sm:$0xff] %v2442
        %2728 = vst.msk [vmem:[%s455 + $0x658] sm:$0xff] %vm2527, %v2444
        %2729 = vst [vmem:[%s455 + $0x660] sm:$0xff] %v1999
        %2730 = vst [vmem:[%s455 + $0x668] sm:$0xff] %v2001
        %2731 = vst [vmem:[%s455 + $0x670] sm:$0xff] %v2448
        %2732 = vst.msk [vmem:[%s455 + $0x678] sm:$0xff] %vm2527, %v2450
        %2733 = vst [vmem:[%s455 + $0x680] sm:$0xff] %v2005
        %2734 = vst [vmem:[%s455 + $0x688] sm:$0xff] %v2007
        %2735 = vst [vmem:[%s455 + $0x690] sm:$0xff] %v2454
        %2736 = vst.msk [vmem:[%s455 + $0x698] sm:$0xff] %vm2527, %v2456
        %2737 = vst [vmem:[%s455 + $0x6a0] sm:$0xff] %v2011
        %2738 = vst [vmem:[%s455 + $0x6a8] sm:$0xff] %v2013
        %2739 = vst [vmem:[%s455 + $0x6b0] sm:$0xff] %v2460
        %2740 = vst.msk [vmem:[%s455 + $0x6b8] sm:$0xff] %vm2527, %v2462
        %2741 = vst [vmem:[%s455 + $0x6c0] sm:$0xff] %v2017
        %2742 = vst [vmem:[%s455 + $0x6c8] sm:$0xff] %v2019
        %2743 = vst [vmem:[%s455 + $0x6d0] sm:$0xff] %v2466
        %2744 = vst.msk [vmem:[%s455 + $0x6d8] sm:$0xff] %vm2527, %v2468
        %2745 = vst [vmem:[%s455 + $0x6e0] sm:$0xff] %v2023
        %2746 = vst [vmem:[%s455 + $0x6e8] sm:$0xff] %v2025
        %2747 = vst [vmem:[%s455 + $0x6f0] sm:$0xff] %v2472
        %2748 = vst.msk [vmem:[%s455 + $0x6f8] sm:$0xff] %vm2527, %v2474
        %2749 = vst [vmem:[%s455 + $0x700] sm:$0xff] %v2029
        %2750 = vst [vmem:[%s455 + $0x708] sm:$0xff] %v2031
        %2751 = vst [vmem:[%s455 + $0x710] sm:$0xff] %v2478
        %2752 = vst.msk [vmem:[%s455 + $0x718] sm:$0xff] %vm2527, %v2480
        %2753 = vst [vmem:[%s455 + $0x720] sm:$0xff] %v2035
        %2754 = vst [vmem:[%s455 + $0x728] sm:$0xff] %v2037
        %2755 = vst [vmem:[%s455 + $0x730] sm:$0xff] %v2484
        %2756 = vst.msk [vmem:[%s455 + $0x738] sm:$0xff] %vm2527, %v2486
        %2757 = vst [vmem:[%s455 + $0x740] sm:$0xff] %v2041
        %2758 = vst [vmem:[%s455 + $0x748] sm:$0xff] %v2043
        %2759 = vst [vmem:[%s455 + $0x750] sm:$0xff] %v2490
        %2760 = vst.msk [vmem:[%s455 + $0x758] sm:$0xff] %vm2527, %v2492
        %2761 = vst [vmem:[%s455 + $0x760] sm:$0xff] %v2047
        %2762 = vst [vmem:[%s455 + $0x768] sm:$0xff] %v2049
        %2763 = vst [vmem:[%s455 + $0x770] sm:$0xff] %v2496
        %2764 = vst.msk [vmem:[%s455 + $0x778] sm:$0xff] %vm2527, %v2498
        %2765 = vst [vmem:[%s455 + $0x780] sm:$0xff] %v2053
        %2766 = vst [vmem:[%s455 + $0x788] sm:$0xff] %v2055
        %2767 = vst [vmem:[%s455 + $0x790] sm:$0xff] %v2502
        %2768 = vst.msk [vmem:[%s455 + $0x798] sm:$0xff] %vm2527, %v2504
        %2769 = vst [vmem:[%s455 + $0x7a0] sm:$0xff] %v2059
        %2770 = vst [vmem:[%s455 + $0x7a8] sm:$0xff] %v2061
        %2771 = vst [vmem:[%s455 + $0x7b0] sm:$0xff] %v2508
        %2772 = vst.msk [vmem:[%s455 + $0x7b8] sm:$0xff] %vm2527, %v2510
        %2773 = vst [vmem:[%s455 + $0x7c0] sm:$0xff] %v2065
        %2774 = vst [vmem:[%s455 + $0x7c8] sm:$0xff] %v2067
        %2775 = vst [vmem:[%s455 + $0x7d0] sm:$0xff] %v2514
        %2776 = vst.msk [vmem:[%s455 + $0x7d8] sm:$0xff] %vm2527, %v2516
        %2777 = vst [vmem:[%s455 + $0x7e0] sm:$0xff] %v2071
        %2778 = vst [vmem:[%s455 + $0x7e8] sm:$0xff] %v2073
        %2779 = vst [vmem:[%s455 + $0x7f0] sm:$0xff] %v2520
        %2780 = vst.msk [vmem:[%s455 + $0x7f8] sm:$0xff] %vm2527, %v2522
        %s2781 = smul.u32 64, %s28
        %p2782 = scmp.lt.s32.totalorder %s27, 1
        %s2783 = scalar_select %p2782, %s27, 1
        %p2784 = scmp.lt.s32.totalorder %s2781, 255
        %s2785 = scalar_select %p2784, %s2781, 255
        %s2786 = smul.addr %s2785, 4
        %s2787 = smul.addr %s2783, 1024
        %s2788 = sadd.s32 %s2786, %s2787
        %s2789 = smul.addr %s2788, 8
        %s2790 = scalar_lea.vmem %s9, %s2789
        // Predicated region
        $region73: #{model_forward.1} parent=55 // pred_check
          %p2791 = pneg %p259
        $region74: #{model_forward.1} parent=55 // pred_check_branch
          %2793 = sbr.rel (%p2791) target = $region76
        $region75: #{model_forward.1} parent=55 // pred_region
          %s2794 = smul.u32 64, %s28
        $region76: #{model_forward.1} parent=55 // pred_fallthru
          _
      $region56: #{model_forward.1} parent=5 // pred_fallthru
        _
      %p2795 = scmp.le.s32.totalorder 2, %s18
      // Predicated region
      $region77: #{model_forward.1} parent=5 // pred_check
        %p2796 = pneg %p2795
      $region78: #{model_forward.1} parent=5 // pred_check_branch
        %2798 = sbr.rel (%p2796) target = $region80
      $region79: #{model_forward.1} parent=5 // pred_region
        %s2799 = ssub.s32 %s18, 2
        // Predicated region
        $region81: #{model_forward.1} parent=79 // pred_check
          %p2800 = pneg %p265
        $region82: #{model_forward.1} parent=79 // pred_check_branch
          %2802 = sbr.rel (%p2800) target = $region84
        $region83: #{model_forward.1} parent=79 // pred_region
          %s2803 = smul.u32 64, %s30
          %p2804 = scmp.lt.s32.totalorder %s29, 1
          %s2805 = scalar_select %p2804, %s29, 1
          %p2806 = scmp.lt.s32.totalorder %s2803, 255
          %s2807 = scalar_select %p2806, %s2803, 255
          %s2808 = smul.addr %s2807, 4
          %s2809 = smul.addr %s2805, 1024
          %s2810 = sadd.s32 %s2808, %s2809
          %s2811 = smul.addr %s2810, 8
          %s2812 = scalar_lea.vmem %s9, %s2811
        $region84: #{model_forward.1} parent=79 // pred_fallthru
          _
      $region80: #{model_forward.1} parent=5 // pred_fallthru
        _
    $region6: #{model_forward.1} parent=1 // loop_footer
      %s22 = sadd.s32 1, %s18
    $region7: #{model_forward.1} parent=1 // loop_footer_branch
      %17 = sbr.rel target = $region3
    $region8: #{model_forward.1} parent=1 // loop_exit
      _
    %2813 = vsyncpa [#allocation3], 1
    %s2814 = scalar_lea.sflag [#allocation3], 1
    %2815 = vsyncpa %s2814, 1
    %2816 = vsyncpa [#allocation5], 1
    %2817 = vsyncpa [#allocation8], 1

</llo_original>
